<compile_context>
chip_gen: v6e
topology: v6e:2x2x1
jax: 0.10.0
libtpu: 0.0.40
codegen_flags: <defaults>
</compile_context>

<pallas_src>
import math

import jax
import jax.numpy as jnp
from jax.experimental import pallas as pl
from jax.experimental.pallas import tpu as pltpu


def _exotic_mc_kernel(params_ref, z_ref, tri_ref, drift_ref, partial_ref):
    """Prices one tile of Monte-Carlo paths; writes the tile's payoff sum."""
    # Scalar option parameters (precomputed on host) from SMEM.
    strike = params_ref[0]
    diffusion = params_ref[1]      # vol * sqrt(dt)
    sign = params_ref[2]           # +1 -> call, -1 -> put
    inv_num_steps = params_ref[3]  # 1 / num_steps (Asian arithmetic average)

    # Prefix sum over the time (lane) axis as a single-pass bf16 MXU matmul
    # against an upper-triangular ones matrix (f32 accumulation):
    #   cum_z[p, t] = sum_{s<=t} z[p, s]
    cum_z = jnp.dot(z_ref[...], tri_ref[...],
                    preferred_element_type=jnp.float32)     # (tile_paths, T) f32

    # GBM paths: log S_t = log(spot) + drift*dt*(t+1) + vol*sqrt(dt)*cum_z.
    # drift_ref is a (1, T) per-step vector -> sublane broadcast.
    s_path = jnp.exp(diffusion * cum_z + drift_ref[...])     # (tile_paths, T) f32

    # Path-dependent (Asian arithmetic-average) payoff.  Average excludes the
    # t=0 spot, matching the reference (intentional).
    avg_price = jnp.sum(s_path, axis=-1, keepdims=True) * inv_num_steps
    payoff = jnp.maximum(sign * (avg_price - strike), 0.0)   # (tile_paths, 1)

    # Per-tile partial sum, written as a lane-dense (8,128)-aligned block
    # (host reads element [i, 0, 0]); discount / mean happen in JAX afterwards.
    tile_sum = jnp.sum(payoff)
    partial_ref[...] = jnp.broadcast_to(tile_sum, partial_ref.shape)


def exotic_option_price(option_type, spot, strike, rate, volatility, expiry, z,
                        *, tile_paths=None):
    """Pallas-backed exotic (Asian-style) option Monte-Carlo pricer.

    z: (num_paths, num_steps) standard-normal draws.
    Returns a scalar float32 price.
    """
    # --- ValidationMixin semantics (host side) ---
    if volatility <= 0.0 or expiry <= 0.0:
        raise ValueError('Volatility and expiry must be positive.')
    if option_type not in ('call', 'put'):
        raise ValueError("Option type must be either 'call' or 'put'.")
    num_paths, num_steps = z.shape
    if num_paths is not None and num_paths <= 0:
        raise ValueError('Number of paths must be a positive integer.')

    assert num_steps % 128 == 0, "num_steps must be a multiple of 128"
    assert num_paths % 8 == 0, "num_paths must be a multiple of 8"

    # --- Path-tile selection ---
    # Target ~4096 paths x 128 steps worth of elements per tile (a few MiB of
    # f32 temporaries, comfortably under the 32 MiB scoped-VMEM budget on all
    # of v5e/v6e/v7x), scaled down if num_steps is larger.
    if tile_paths is None:
        cap_elems = 4096 * 128
        cap = max(8, ((cap_elems // num_steps) // 8) * 8)
        limit = min(cap, num_paths)
        div16 = [t for t in range(16, limit + 1, 16) if num_paths % t == 0]
        div8 = [t for t in range(8, limit + 1, 8) if num_paths % t == 0]
        divisors = div16 or div8
        if divisors:
            tile_paths = max(divisors)
            # Keep >= 2 grid steps so both v7x TensorCores get work.
            if tile_paths == num_paths and num_paths >= 16 \
                    and (num_paths // 2) % 8 == 0:
                tile_paths = num_paths // 2
        else:
            # TODO(synk): pad awkward path counts instead of one giant tile.
            tile_paths = num_paths
    assert num_paths % tile_paths == 0
    num_tiles = num_paths // tile_paths

    # --- Host-side scalar / small-array prep ---
    dt = expiry / num_steps
    drift_dt = (rate - 0.5 * volatility * volatility) * dt
    diffusion = volatility * math.sqrt(dt)
    sign = 1.0 if option_type == 'call' else -1.0

    params = jnp.array(
        [strike, diffusion, sign, 1.0 / num_steps, 0.0, 0.0, 0.0, 0.0],
        dtype=jnp.float32)

    # Per-step affine term: log(spot) + drift*dt*(t+1)  (t = 0..T-1).
    drift_vec = (math.log(spot)
                 + drift_dt * jnp.arange(1, num_steps + 1, dtype=jnp.float32)
                 ).reshape(1, num_steps).astype(jnp.float32)

    # Upper-triangular ones matrix (bf16, ones are exact):  z @ tri == cumsum(z, -1).
    tri = jnp.triu(jnp.ones((num_steps, num_steps), dtype=jnp.bfloat16))

    # Stream the (only large) noise array as bf16; it feeds the MXU directly.
    z_bf16 = z.astype(jnp.bfloat16)

    partials = pl.pallas_call(
        _exotic_mc_kernel,
        out_shape=jax.ShapeDtypeStruct((num_tiles, 8, 128), jnp.float32),
        grid_spec=pltpu.PrefetchScalarGridSpec(
            num_scalar_prefetch=0,
            grid=(num_tiles,),
            in_specs=[
                # scalar params in SMEM
                pl.BlockSpec(memory_space=pltpu.MemorySpace.SMEM),
                # per-tile Monte-Carlo noise (bf16, halves HBM traffic)
                pl.BlockSpec((tile_paths, num_steps), lambda i: (i, 0)),
                # triangular scan matrix, constant block index -> fetched once
                pl.BlockSpec((num_steps, num_steps), lambda i: (0, 0)),
                # per-step drift/log-spot vector, constant block index
                pl.BlockSpec((1, num_steps), lambda i: (0, 0)),
            ],
            # lane-dense, (8,128)-aligned per-tile partial-sum block
            out_specs=pl.BlockSpec((1, 8, 128), lambda i: (i, 0, 0)),
        ),
        compiler_params=pltpu.CompilerParams(
            # independent per-tile partial sums -> megacore-shardable on v7x
            dimension_semantics=("parallel",),
            vmem_limit_bytes=32 * 1024 * 1024),
    )(params, z_bf16, tri, drift_vec)

    discount = math.exp(-rate * expiry)
    total = jnp.sum(partials[:, 0, 0])
    return (jnp.float32(discount) * total / num_paths).astype(jnp.float32)


if __name__ == "__main__":
    key = jax.random.PRNGKey(0)
    num_paths, num_steps = 2048, 128
    z = jax.random.normal(key, (num_paths, num_steps), dtype=jnp.float32)

    price = exotic_option_price(
        option_type='call',
        spot=100.0, strike=100.0, rate=0.05, volatility=0.2, expiry=1.0,
        z=z)
    jax.block_until_ready(price)

    # Pure-JAX reference using the same bf16-rounded noise the kernel consumes.
    # (bf16 z is a deliberate tolerance decision; ~1e-3 relative vs f32 torch.)
    z_eff = z.astype(jnp.bfloat16).astype(jnp.float32)
    dt = 1.0 / num_steps
    log_path = jnp.cumsum(
        (0.05 - 0.5 * 0.2 ** 2) * dt + 0.2 * jnp.sqrt(dt) * z_eff, axis=-1)
    s = 100.0 * jnp.exp(log_path)
    ref = jnp.exp(-0.05) * jnp.mean(
        jnp.maximum(jnp.mean(s, axis=-1) - 100.0, 0.0))
    assert jnp.allclose(price, ref, rtol=2e-3, atol=2e-3), (price, ref)

    print("KERNEL_OK")
</pallas_src>

<mosaic_0001>
module attributes {stable_mosaic.version = 11 : i64} {
  func.func @_exotic_mc_kernel(%arg0: i32, %arg1: memref<8xf32, #tpu.memory_space<smem>>, %arg2: memref<1024x128xbf16, #tpu.memory_space<vmem>>, %arg3: memref<128x128xbf16, #tpu.memory_space<vmem>>, %arg4: memref<1x128xf32, #tpu.memory_space<vmem>>, %arg5: memref<1x8x128xf32, #tpu.memory_space<vmem>>) attributes {dimension_semantics = [#tpu.dimension_semantics<parallel>], iteration_bounds = array<i64: 2>, scalar_prefetch = 0 : i64, scratch_operands = 0 : i64, tpu.core_type = #tpu.core_type<tc>, window_params = [{transform_indices = @transform_0, window_bounds = array<i64: 8>}, {transform_indices = @transform_1, window_bounds = array<i64: 1024, 128>}, {pipeline_mode = #tpu.pipeline_mode<synchronous>, transform_indices = @transform_2, window_bounds = array<i64: 128, 128>}, {pipeline_mode = #tpu.pipeline_mode<synchronous>, transform_indices = @transform_3, window_bounds = array<i64: 1, 128>}, {transform_indices = @transform_4, window_bounds = array<i64: 1, 8, 128>}]} {
    %c0 = arith.constant 0 : index
    %0 = memref.load %arg1[%c0] : memref<8xf32, #tpu.memory_space<smem>>
    %c1 = arith.constant 1 : index
    %1 = memref.load %arg1[%c1] : memref<8xf32, #tpu.memory_space<smem>>
    %c2 = arith.constant 2 : index
    %2 = memref.load %arg1[%c2] : memref<8xf32, #tpu.memory_space<smem>>
    %c3 = arith.constant 3 : index
    %3 = memref.load %arg1[%c3] : memref<8xf32, #tpu.memory_space<smem>>
    %c0_0 = arith.constant 0 : index
    %c0_1 = arith.constant 0 : index
    %4 = vector.load %arg2[%c0_0, %c0_1] : memref<1024x128xbf16, #tpu.memory_space<vmem>>, vector<1024x128xbf16>
    %c0_2 = arith.constant 0 : index
    %c0_3 = arith.constant 0 : index
    %5 = vector.load %arg3[%c0_2, %c0_3] : memref<128x128xbf16, #tpu.memory_space<vmem>>, vector<128x128xbf16>
    %cst = arith.constant dense<0.000000e+00> : vector<1024x128xf32>
    %6 = tpu.matmul %4, %5, %cst {dimension_numbers = #tpu.dot_dimension_numbers<[1], [0], [0], [1], [0, 0, 1, 1], [], []>} : vector<1024x128xbf16>, vector<128x128xbf16>, vector<1024x128xf32> -> vector<1024x128xf32>
    %7 = vector.broadcast %1 : f32 to vector<1024x128xf32>
    %8 = arith.mulf %7, %6 : vector<1024x128xf32>
    %c0_4 = arith.constant 0 : index
    %c0_5 = arith.constant 0 : index
    %9 = vector.load %arg4[%c0_4, %c0_5] : memref<1x128xf32, #tpu.memory_space<vmem>>, vector<1x128xf32>
    %10 = vector.broadcast %9 : vector<1x128xf32> to vector<1024x128xf32>
    %11 = arith.addf %8, %10 : vector<1024x128xf32>
    %12 = math.exp %11 : vector<1024x128xf32>
    %cst_6 = arith.constant dense<0.000000e+00> : vector<1024xf32>
    %13 = vector.multi_reduction <add>, %12, %cst_6 [1] : vector<1024x128xf32> to vector<1024xf32>
    %14 = vector.shape_cast %13 : vector<1024xf32> to vector<1024x1xf32>
    %15 = vector.broadcast %3 : f32 to vector<1024x1xf32>
    %16 = arith.mulf %14, %15 : vector<1024x1xf32>
    %17 = vector.broadcast %0 : f32 to vector<1024x1xf32>
    %18 = arith.subf %16, %17 : vector<1024x1xf32>
    %19 = vector.broadcast %2 : f32 to vector<1024x1xf32>
    %20 = arith.mulf %19, %18 : vector<1024x1xf32>
    %cst_7 = arith.constant 0.000000e+00 : f32
    %21 = vector.broadcast %cst_7 : f32 to vector<1024x1xf32>
    %22 = arith.maximumf %20, %21 : vector<1024x1xf32>
    %23 = vector.shape_cast %22 : vector<1024x1xf32> to vector<1x1024x1xf32>
    %cst_8 = arith.constant dense<0.000000e+00> : vector<1xf32>
    %24 = vector.multi_reduction <add>, %23, %cst_8 [1, 2] : vector<1x1024x1xf32> to vector<1xf32>
    %25 = vector.shape_cast %24 : vector<1xf32> to vector<1x1x1xf32>
    %26 = vector.extract %25[0, 0, 0] : f32 from vector<1x1x1xf32>
    %27 = vector.broadcast %26 : f32 to vector<1x8x128xf32>
    %c0_9 = arith.constant 0 : index
    %c0_10 = arith.constant 0 : index
    %c0_11 = arith.constant 0 : index
    %28 = vector.load %arg5[%c0_9, %c0_10, %c0_11] : memref<1x8x128xf32, #tpu.memory_space<vmem>>, vector<1x8x128xf32>
    tpu.vector_store %arg5[%c0_9, %c0_10, %c0_11], %27 {strides = array<i32>} : memref<1x8x128xf32, #tpu.memory_space<vmem>>, vector<1x8x128xf32>,
    return
  }
  func.func @transform_0(%arg0: i32) -> i32 {
    %c0_i32 = arith.constant 0 : i32
    %c0_i32_0 = arith.constant 0 : i32
    return %c0_i32 : i32
  }
  func.func @transform_1(%arg0: i32) -> (i32, i32) {
    %c0_i32 = arith.constant 0 : i32
    %c0_i32_0 = arith.constant 0 : i32
    return %arg0, %c0_i32 : i32, i32
  }
  func.func @transform_2(%arg0: i32) -> (i32, i32) {
    %c0_i32 = arith.constant 0 : i32
    %c0_i32_0 = arith.constant 0 : i32
    %c0_i32_1 = arith.constant 0 : i32
    return %c0_i32, %c0_i32_0 : i32, i32
  }
  func.func @transform_3(%arg0: i32) -> (i32, i32) {
    %c0_i32 = arith.constant 0 : i32
    %c0_i32_0 = arith.constant 0 : i32
    %c0_i32_1 = arith.constant 0 : i32
    return %c0_i32, %c0_i32_0 : i32, i32
  }
  func.func @transform_4(%arg0: i32) -> (i32, i32, i32) {
    %c0_i32 = arith.constant 0 : i32
    %c0_i32_0 = arith.constant 0 : i32
    %c0_i32_1 = arith.constant 0 : i32
    return %arg0, %c0_i32, %c0_i32_0 : i32, i32, i32
  }
}

</mosaic_0001>

<llo_original>
// kernel: tpu_custom_call.1
$region0: #{tpu_custom_call.1}
  #allocation0 [shape = 'u32[]', space=smem, size = 0x4, offset = 0x4, fixed_abs, tag = 'smem constant byte address 0x4 - core index']
  #allocation1 [shape = 'u32[144,128]{1,0:T(1,128)}', space=vmem, size = 0x12000, scoped, tag = 'internal scratch']
  %s0 = inlined_call_operand.hbm [shape: f32[8], index: 0, kind: input, shape index: {}]
  %s1 = inlined_call_operand.hbm [shape: bf16[2048,128], index: 1, kind: input, shape index: {}]
  %s2 = inlined_call_operand.hbm [shape: bf16[128,128], index: 2, kind: input, shape index: {}]
  %s3 = inlined_call_operand.vmem [shape: f32[1,128], index: 3, kind: input, shape index: {}]
  %s4 = inlined_call_operand.hbm [shape: f32[2,8,128], index: 4, kind: output, shape index: {}]
  %s5 = sld [smem:[#allocation0]]
  $region61: #{tpu_custom_call.1} parent=0
    _
  %s7 = ssub.s32 1, %s5
  %s8 = scalar_select 0, %s7, %s5
  $region1: #{tpu_custom_call.1} parent=0
    #allocation2 [shape = 'u8[512]{0}', space=smem, size = 0x200, scoped, tag = 'input window, operand 0, single buffered']
    #allocation3 [shape = 's32[2]{0}', space=sflag, size = 0x8, scoped, tag = 'scoped memory for tpu_custom_call.1']
    #allocation4 [shape = 's32[2]{0}', space=sflag, size = 0x8, scoped, tag = 'scoped memory for tpu_custom_call.1']
    #allocation5 [shape = 's32[2]{0}', space=sflag, size = 0x8, scoped, tag = 'scoped memory for tpu_custom_call.1']
    #allocation6 [shape = 'u8[524288]{0}', space=vmem, size = 0x80000, scoped, tag = 'input window, operand 1']
    #allocation7 [shape = 'u8[32768]{0}', space=vmem, size = 0x8000, scoped, tag = 'input window, operand 2, single buffered']
    #allocation8 [shape = 's32[1]{0}', space=sflag, size = 0x4, scoped, tag = 'scoped memory for tpu_custom_call.1']
    #allocation9 [shape = 'u8[8192]{0}', space=vmem, size = 0x2000, scoped, tag = 'output window, operand 0']
    %9 = vsyncpa [#allocation5], 0
    %10 = vsyncpa [#allocation3], 0
    %s11 = scalar_lea.sflag [#allocation3], 1
    %12 = vsyncpa %s11, 0
    %13 = vsyncpa [#allocation8], 0
    %14 = vsyncpa [#allocation4], 0
    %s15 = scalar_lea.sflag [#allocation4], 1
    %16 = vsyncpa %s15, 0
    loop: start=0, step=1, limit=4
    $region2: #{tpu_custom_call.1} parent=1 // loop_pre_header
      _
    $region3: #{tpu_custom_call.1} parent=1 // loop_header
      %s18 = sphi 0, %s22
      %p19 = scmp.ge.s32.totalorder %s18, 4
      %s26 = sphi 0, %s26
      %s28 = sphi 0, %s26
      %s29 = sphi 0, %s28
      %s43 = sphi 0, %s29
      %s49 = sphi 0, %s51
      %s52 = sphi 0, %s49
      %s53 = sphi 0, %s52
      %s69 = sphi 0, %s53
      %s73 = sphi 0, %s73
      %s75 = sphi 0, %s73
      %s76 = sphi 0, %s75
      %s90 = sphi 0, %s76
      %s94 = sphi 0, %s94
      %s96 = sphi 0, %s94
      %s97 = sphi 0, %s96
      %s111 = sphi 0, %s97
      %s117 = sphi 0, %s119
      %s120 = sphi 0, %s117
      %s121 = sphi 0, %s120
      %s137 = sphi 0, %s121
    $region4: #{tpu_custom_call.1} parent=1 // loop_header_branch
      %21 = sbr.rel (%p19) target = $region8
    $region5: #{tpu_custom_call.1} parent=1 // loop_body
      %s23 = ssub.s32 %s18, 1
      %s24 = ssub.s32 %s18, 2
      %s25 = sadd.s32 %s18, 1
      %s27 = sadd.s32 %s26, 1
      %p30 = scmp.eq.s32.totalorder %s18, 1
      %p31 = scmp.ne.s32.totalorder %s26, %s28
      %p32 = scmp.eq.s32.totalorder %s18, 0
      %p33 = por %p31, %p32
      %p34 = scmp.ne.s32.totalorder %s26, %s28
      %p35 = scmp.eq.s32.totalorder %s23, 1
      %p36 = por %p34, %p35
      %p37 = scmp.ne.s32.totalorder %s28, %s29
      %p38 = scmp.eq.s32.totalorder %s23, 0
      %p39 = por %p37, %p38
      %p40 = scmp.ne.s32.totalorder %s28, %s29
      %p41 = scmp.eq.s32.totalorder %s24, 1
      %p42 = por %p40, %p41
      %p44 = scmp.ne.s32.totalorder %s29, %s43
      %p45 = scmp.eq.s32.totalorder %s24, 0
      %p46 = por %p44, %p45
      %s47 = ssub.s32 %s18, %s25
      %p48 = scmp.eq.s32.totalorder %s47, 0
      %s50 = sadd.s32 %s49, 1
      %s51 = scalar_select %p48, %s49, %s50
      %p54 = pneg %p48
      %p55 = scmp.eq.s32.totalorder %s18, 1
      %p56 = por %p54, %p55
      %p57 = scmp.ne.s32.totalorder %s49, %s52
      %p58 = scmp.eq.s32.totalorder %s18, 0
      %p59 = por %p57, %p58
      %p60 = scmp.ne.s32.totalorder %s49, %s52
      %p61 = scmp.eq.s32.totalorder %s23, 1
      %p62 = por %p60, %p61
      %p63 = scmp.ne.s32.totalorder %s52, %s53
      %p64 = scmp.eq.s32.totalorder %s23, 0
      %p65 = por %p63, %p64
      %p66 = scmp.ne.s32.totalorder %s52, %s53
      %p67 = scmp.eq.s32.totalorder %s24, 1
      %p68 = por %p66, %p67
      %p70 = scmp.ne.s32.totalorder %s53, %s69
      %p71 = scmp.eq.s32.totalorder %s24, 0
      %p72 = por %p70, %p71
      %s74 = sadd.s32 %s73, 1
      %p77 = scmp.eq.s32.totalorder %s18, 1
      %p78 = scmp.ne.s32.totalorder %s73, %s75
      %p79 = scmp.eq.s32.totalorder %s18, 0
      %p80 = por %p78, %p79
      %p81 = scmp.ne.s32.totalorder %s73, %s75
      %p82 = scmp.eq.s32.totalorder %s23, 1
      %p83 = por %p81, %p82
      %p84 = scmp.ne.s32.totalorder %s75, %s76
      %p85 = scmp.eq.s32.totalorder %s23, 0
      %p86 = por %p84, %p85
      %p87 = scmp.ne.s32.totalorder %s75, %s76
      %p88 = scmp.eq.s32.totalorder %s24, 1
      %p89 = por %p87, %p88
      %p91 = scmp.ne.s32.totalorder %s76, %s90
      %p92 = scmp.eq.s32.totalorder %s24, 0
      %p93 = por %p91, %p92
      %s95 = sadd.s32 %s94, 1
      %p98 = scmp.eq.s32.totalorder %s18, 1
      %p99 = scmp.ne.s32.totalorder %s94, %s96
      %p100 = scmp.eq.s32.totalorder %s18, 0
      %p101 = por %p99, %p100
      %p102 = scmp.ne.s32.totalorder %s94, %s96
      %p103 = scmp.eq.s32.totalorder %s23, 1
      %p104 = por %p102, %p103
      %p105 = scmp.ne.s32.totalorder %s96, %s97
      %p106 = scmp.eq.s32.totalorder %s23, 0
      %p107 = por %p105, %p106
      %p108 = scmp.ne.s32.totalorder %s96, %s97
      %p109 = scmp.eq.s32.totalorder %s24, 1
      %p110 = por %p108, %p109
      %p112 = scmp.ne.s32.totalorder %s97, %s111
      %p113 = scmp.eq.s32.totalorder %s24, 0
      %p114 = por %p112, %p113
      %s115 = ssub.s32 %s18, %s25
      %p116 = scmp.eq.s32.totalorder %s115, 0
      %s118 = sadd.s32 %s117, 1
      %s119 = scalar_select %p116, %s117, %s118
      %p122 = pneg %p116
      %p123 = scmp.eq.s32.totalorder %s18, 1
      %p124 = por %p122, %p123
      %p125 = scmp.ne.s32.totalorder %s117, %s120
      %p126 = scmp.eq.s32.totalorder %s18, 0
      %p127 = por %p125, %p126
      %p128 = scmp.ne.s32.totalorder %s117, %s120
      %p129 = scmp.eq.s32.totalorder %s23, 1
      %p130 = por %p128, %p129
      %p131 = scmp.ne.s32.totalorder %s120, %s121
      %p132 = scmp.eq.s32.totalorder %s23, 0
      %p133 = por %p131, %p132
      %p134 = scmp.ne.s32.totalorder %s120, %s121
      %p135 = scmp.eq.s32.totalorder %s24, 1
      %p136 = por %p134, %p135
      %p138 = scmp.ne.s32.totalorder %s121, %s137
      %p139 = scmp.eq.s32.totalorder %s24, 0
      %p140 = por %p138, %p139
      %p141 = scmp.le.s32.totalorder 1, %s18
      %p142 = scmp.lt.s32.totalorder %s18, 3
      %p143 = pnand %p141, %p142
      %p144 = pneg %p143
      // Predicated region
      $region9: #{tpu_custom_call.1} parent=5 // pred_check
        _
      $region10: #{tpu_custom_call.1} parent=5 // pred_check_branch
        %146 = sbr.rel (%p143) target = $region12
      $region11: #{tpu_custom_call.1} parent=5 // pred_region
        %s147 = ssub.s32 %s18, 1
        // Predicated region
        $region13: #{tpu_custom_call.1} parent=11 // pred_check
          %p148 = pneg %p39
        $region14: #{tpu_custom_call.1} parent=11 // pred_check_branch
          %150 = sbr.rel (%p148) target = $region16
        $region15: #{tpu_custom_call.1} parent=11 // pred_region
          %s152 = ssub.s32 16, 16
          %153 = vsyncadd [#allocation5], %s152
          %156 = dma.hbm_to_smem %s0, 16, [#allocation2], [#allocation5]
        $region16: #{tpu_custom_call.1} parent=11 // pred_fallthru
          _
        // Predicated region
        $region17: #{tpu_custom_call.1} parent=11 // pred_check
          %p157 = pneg %p86
        $region18: #{tpu_custom_call.1} parent=11 // pred_check_branch
          %159 = sbr.rel (%p157) target = $region20
        $region19: #{tpu_custom_call.1} parent=11 // pred_region
          %s161 = ssub.s32 1024, 1024
          %162 = vsyncadd [#allocation8], %s161
          %s163 = sshll.u32 [#allocation7], 4
          %s164 = int_to_ptr.vmem [resolvable:$true] %s163
          %169 = dma.hbm_to_vmem [thread:$0]  %s2, 1024, %s164, [#allocation8], 64, 64, 4
        $region20: #{tpu_custom_call.1} parent=11 // pred_fallthru
          _
        // Predicated region
        $region21: #{tpu_custom_call.1} parent=11 // pred_check
          %p170 = pneg %p107
        $region22: #{tpu_custom_call.1} parent=11 // pred_check_branch
          %172 = sbr.rel (%p170) target = $region24
        $region23: #{tpu_custom_call.1} parent=11 // pred_region
          _
        $region24: #{tpu_custom_call.1} parent=11 // pred_fallthru
          _
      $region12: #{tpu_custom_call.1} parent=5 // pred_fallthru
        _
      %p173 = scmp.lt.s32.totalorder %s18, 2
      // Predicated region
      $region25: #{tpu_custom_call.1} parent=5 // pred_check
        %p174 = pneg %p173
      $region26: #{tpu_custom_call.1} parent=5 // pred_check_branch
        %176 = sbr.rel (%p174) target = $region28
      $region27: #{tpu_custom_call.1} parent=5 // pred_region
        // Predicated region
        $region29: #{tpu_custom_call.1} parent=27 // pred_check
          %p177 = pneg %p59
        $region30: #{tpu_custom_call.1} parent=27 // pred_check_branch
          %179 = sbr.rel (%p177) target = $region32
        $region31: #{tpu_custom_call.1} parent=27 // pred_region
          %s180 = sand.u32 %s49, 1
          %s181 = scalar_lea.sflag [#allocation3], %s180
          %s182 = sand.u32 %s49, 1
          %s183 = smul.addr %s182, 512
          %s184 = scalar_lea.vmem [#allocation6], %s183
          %s185 = smul.u32 128, %s18
          %s187 = ssub.s32 8192, 8192
          %188 = vsyncadd %s181, %s187
          %s189 = smul.addr %s185, 64
          %s190 = scalar_lea.hbm %s1, %s189
          %s191 = sshll.u32 %s184, 4
          %s192 = int_to_ptr.vmem [resolvable:$true] %s191
          %197 = dma.hbm_to_vmem [thread:$0]  %s190, 8192, %s192, %s181, 64, 64, 4
        $region32: #{tpu_custom_call.1} parent=27 // pred_fallthru
          _
      $region28: #{tpu_custom_call.1} parent=5 // pred_fallthru
        _
      %p198 = scmp.le.s32.totalorder 1, %s18
      %p199 = scmp.lt.s32.totalorder %s18, 3
      %p200 = pnand %p198, %p199
      %p201 = pneg %p200
      // Predicated region
      $region33: #{tpu_custom_call.1} parent=5 // pred_check
        _
      $region34: #{tpu_custom_call.1} parent=5 // pred_check_branch
        %203 = sbr.rel (%p200) target = $region36
      $region35: #{tpu_custom_call.1} parent=5 // pred_region
        %s204 = ssub.s32 %s18, 1
        // Predicated region
        $region37: #{tpu_custom_call.1} parent=35 // pred_check
          %p205 = pneg %p39
        $region38: #{tpu_custom_call.1} parent=35 // pred_check_branch
          %207 = sbr.rel (%p205) target = $region40
        $region39: #{tpu_custom_call.1} parent=35 // pred_region
          %208 = dma.done [#allocation5], 16
        $region40: #{tpu_custom_call.1} parent=35 // pred_fallthru
          _
        %s209 = sand.u32 %s52, 1
        %s210 = scalar_lea.sflag [#allocation3], %s209
        %s211 = sand.u32 %s52, 1
        %s212 = smul.addr %s211, 512
        %s213 = scalar_lea.vmem [#allocation6], %s212
        // Predicated region
        $region41: #{tpu_custom_call.1} parent=35 // pred_check
          %p214 = pneg %p65
        $region42: #{tpu_custom_call.1} parent=35 // pred_check_branch
          %216 = sbr.rel (%p214) target = $region44
        $region43: #{tpu_custom_call.1} parent=35 // pred_region
          %217 = dma.done %s210, 8192
        $region44: #{tpu_custom_call.1} parent=35 // pred_fallthru
          _
        // Predicated region
        $region45: #{tpu_custom_call.1} parent=35 // pred_check
          %p218 = pneg %p86
        $region46: #{tpu_custom_call.1} parent=35 // pred_check_branch
          %220 = sbr.rel (%p218) target = $region48
        $region47: #{tpu_custom_call.1} parent=35 // pred_region
          %221 = dma.done [#allocation8], 1024
        $region48: #{tpu_custom_call.1} parent=35 // pred_fallthru
          _
        %222 = sfence
        %p223 = pneg %p39
        %p224 = pneg %p36
        %s225 = sand.u32 %s52, 1
        %s226 = scalar_lea.sflag [#allocation3], %s225
        %s227 = sand.u32 %s52, 1
        %s228 = smul.addr %s227, 512
        %s229 = scalar_lea.vmem [#allocation6], %s228
        %p230 = pneg %p65
        %p231 = pneg %p62
        %p232 = pneg %p86
        %p233 = pneg %p83
        %p234 = pneg %p107
        %p235 = pneg %p104
        %p236 = pneg %p133
        %p237 = pneg %p130
        %s238 = sand.u32 %s120, 1
        %s239 = scalar_lea.sflag [#allocation4], %s238
        %s240 = sand.u32 %s120, 1
        %s241 = smul.addr %s240, 8
        %s242 = scalar_lea.vmem [#allocation9], %s241
        %s243 = smul.u32 128, %s23
        %s245 = sld [smem:[#allocation2]]
        %s246 = sld [smem:[#allocation2 + $0x1]]
        %s247 = sld [smem:[#allocation2 + $0x2]]
        %s248 = sld [smem:[#allocation2 + $0x3]]
        %v249 = vld [vmem:[%s213] sm:$0xf]
        %v250 = vld [vmem:[%s213 + $0x4] sm:$0xf]
        %v251 = vld [vmem:[%s213 + $0x8] sm:$0xf]
        %v252 = vld [vmem:[%s213 + $0xc] sm:$0xf]
        %v253 = vld [vmem:[%s213 + $0x10] sm:$0xf]
        %v254 = vld [vmem:[%s213 + $0x14] sm:$0xf]
        %v255 = vld [vmem:[%s213 + $0x18] sm:$0xf]
        %v256 = vld [vmem:[%s213 + $0x1c] sm:$0xf]
        %v257 = vld [vmem:[%s213 + $0x20] sm:$0xf]
        %v258 = vld [vmem:[%s213 + $0x24] sm:$0xf]
        %v259 = vld [vmem:[%s213 + $0x28] sm:$0xf]
        %v260 = vld [vmem:[%s213 + $0x2c] sm:$0xf]
        %v261 = vld [vmem:[%s213 + $0x30] sm:$0xf]
        %v262 = vld [vmem:[%s213 + $0x34] sm:$0xf]
        %v263 = vld [vmem:[%s213 + $0x38] sm:$0xf]
        %v264 = vld [vmem:[%s213 + $0x3c] sm:$0xf]
        %v265 = vld [vmem:[%s213 + $0x40] sm:$0xf]
        %v266 = vld [vmem:[%s213 + $0x44] sm:$0xf]
        %v267 = vld [vmem:[%s213 + $0x48] sm:$0xf]
        %v268 = vld [vmem:[%s213 + $0x4c] sm:$0xf]
        %v269 = vld [vmem:[%s213 + $0x50] sm:$0xf]
        %v270 = vld [vmem:[%s213 + $0x54] sm:$0xf]
        %v271 = vld [vmem:[%s213 + $0x58] sm:$0xf]
        %v272 = vld [vmem:[%s213 + $0x5c] sm:$0xf]
        %v273 = vld [vmem:[%s213 + $0x60] sm:$0xf]
        %v274 = vld [vmem:[%s213 + $0x64] sm:$0xf]
        %v275 = vld [vmem:[%s213 + $0x68] sm:$0xf]
        %v276 = vld [vmem:[%s213 + $0x6c] sm:$0xf]
        %v277 = vld [vmem:[%s213 + $0x70] sm:$0xf]
        %v278 = vld [vmem:[%s213 + $0x74] sm:$0xf]
        %v279 = vld [vmem:[%s213 + $0x78] sm:$0xf]
        %v280 = vld [vmem:[%s213 + $0x7c] sm:$0xf]
        %v281 = vld [vmem:[%s213 + $0x80] sm:$0xf]
        %v282 = vld [vmem:[%s213 + $0x84] sm:$0xf]
        %v283 = vld [vmem:[%s213 + $0x88] sm:$0xf]
        %v284 = vld [vmem:[%s213 + $0x8c] sm:$0xf]
        %v285 = vld [vmem:[%s213 + $0x90] sm:$0xf]
        %v286 = vld [vmem:[%s213 + $0x94] sm:$0xf]
        %v287 = vld [vmem:[%s213 + $0x98] sm:$0xf]
        %v288 = vld [vmem:[%s213 + $0x9c] sm:$0xf]
        %v289 = vld [vmem:[%s213 + $0xa0] sm:$0xf]
        %v290 = vld [vmem:[%s213 + $0xa4] sm:$0xf]
        %v291 = vld [vmem:[%s213 + $0xa8] sm:$0xf]
        %v292 = vld [vmem:[%s213 + $0xac] sm:$0xf]
        %v293 = vld [vmem:[%s213 + $0xb0] sm:$0xf]
        %v294 = vld [vmem:[%s213 + $0xb4] sm:$0xf]
        %v295 = vld [vmem:[%s213 + $0xb8] sm:$0xf]
        %v296 = vld [vmem:[%s213 + $0xbc] sm:$0xf]
        %v297 = vld [vmem:[%s213 + $0xc0] sm:$0xf]
        %v298 = vld [vmem:[%s213 + $0xc4] sm:$0xf]
        %v299 = vld [vmem:[%s213 + $0xc8] sm:$0xf]
        %v300 = vld [vmem:[%s213 + $0xcc] sm:$0xf]
        %v301 = vld [vmem:[%s213 + $0xd0] sm:$0xf]
        %v302 = vld [vmem:[%s213 + $0xd4] sm:$0xf]
        %v303 = vld [vmem:[%s213 + $0xd8] sm:$0xf]
        %v304 = vld [vmem:[%s213 + $0xdc] sm:$0xf]
        %v305 = vld [vmem:[%s213 + $0xe0] sm:$0xf]
        %v306 = vld [vmem:[%s213 + $0xe4] sm:$0xf]
        %v307 = vld [vmem:[%s213 + $0xe8] sm:$0xf]
        %v308 = vld [vmem:[%s213 + $0xec] sm:$0xf]
        %v309 = vld [vmem:[%s213 + $0xf0] sm:$0xf]
        %v310 = vld [vmem:[%s213 + $0xf4] sm:$0xf]
        %v311 = vld [vmem:[%s213 + $0xf8] sm:$0xf]
        %v312 = vld [vmem:[%s213 + $0xfc] sm:$0xf]
        %v313 = vld [vmem:[%s213 + $0x100] sm:$0xf]
        %v314 = vld [vmem:[%s213 + $0x104] sm:$0xf]
        %v315 = vld [vmem:[%s213 + $0x108] sm:$0xf]
        %v316 = vld [vmem:[%s213 + $0x10c] sm:$0xf]
        %v317 = vld [vmem:[%s213 + $0x110] sm:$0xf]
        %v318 = vld [vmem:[%s213 + $0x114] sm:$0xf]
        %v319 = vld [vmem:[%s213 + $0x118] sm:$0xf]
        %v320 = vld [vmem:[%s213 + $0x11c] sm:$0xf]
        %v321 = vld [vmem:[%s213 + $0x120] sm:$0xf]
        %v322 = vld [vmem:[%s213 + $0x124] sm:$0xf]
        %v323 = vld [vmem:[%s213 + $0x128] sm:$0xf]
        %v324 = vld [vmem:[%s213 + $0x12c] sm:$0xf]
        %v325 = vld [vmem:[%s213 + $0x130] sm:$0xf]
        %v326 = vld [vmem:[%s213 + $0x134] sm:$0xf]
        %v327 = vld [vmem:[%s213 + $0x138] sm:$0xf]
        %v328 = vld [vmem:[%s213 + $0x13c] sm:$0xf]
        %v329 = vld [vmem:[%s213 + $0x140] sm:$0xf]
        %v330 = vld [vmem:[%s213 + $0x144] sm:$0xf]
        %v331 = vld [vmem:[%s213 + $0x148] sm:$0xf]
        %v332 = vld [vmem:[%s213 + $0x14c] sm:$0xf]
        %v333 = vld [vmem:[%s213 + $0x150] sm:$0xf]
        %v334 = vld [vmem:[%s213 + $0x154] sm:$0xf]
        %v335 = vld [vmem:[%s213 + $0x158] sm:$0xf]
        %v336 = vld [vmem:[%s213 + $0x15c] sm:$0xf]
        %v337 = vld [vmem:[%s213 + $0x160] sm:$0xf]
        %v338 = vld [vmem:[%s213 + $0x164] sm:$0xf]
        %v339 = vld [vmem:[%s213 + $0x168] sm:$0xf]
        %v340 = vld [vmem:[%s213 + $0x16c] sm:$0xf]
        %v341 = vld [vmem:[%s213 + $0x170] sm:$0xf]
        %v342 = vld [vmem:[%s213 + $0x174] sm:$0xf]
        %v343 = vld [vmem:[%s213 + $0x178] sm:$0xf]
        %v344 = vld [vmem:[%s213 + $0x17c] sm:$0xf]
        %v345 = vld [vmem:[%s213 + $0x180] sm:$0xf]
        %v346 = vld [vmem:[%s213 + $0x184] sm:$0xf]
        %v347 = vld [vmem:[%s213 + $0x188] sm:$0xf]
        %v348 = vld [vmem:[%s213 + $0x18c] sm:$0xf]
        %v349 = vld [vmem:[%s213 + $0x190] sm:$0xf]
        %v350 = vld [vmem:[%s213 + $0x194] sm:$0xf]
        %v351 = vld [vmem:[%s213 + $0x198] sm:$0xf]
        %v352 = vld [vmem:[%s213 + $0x19c] sm:$0xf]
        %v353 = vld [vmem:[%s213 + $0x1a0] sm:$0xf]
        %v354 = vld [vmem:[%s213 + $0x1a4] sm:$0xf]
        %v355 = vld [vmem:[%s213 + $0x1a8] sm:$0xf]
        %v356 = vld [vmem:[%s213 + $0x1ac] sm:$0xf]
        %v357 = vld [vmem:[%s213 + $0x1b0] sm:$0xf]
        %v358 = vld [vmem:[%s213 + $0x1b4] sm:$0xf]
        %v359 = vld [vmem:[%s213 + $0x1b8] sm:$0xf]
        %v360 = vld [vmem:[%s213 + $0x1bc] sm:$0xf]
        %v361 = vld [vmem:[%s213 + $0x1c0] sm:$0xf]
        %v362 = vld [vmem:[%s213 + $0x1c4] sm:$0xf]
        %v363 = vld [vmem:[%s213 + $0x1c8] sm:$0xf]
        %v364 = vld [vmem:[%s213 + $0x1cc] sm:$0xf]
        %v365 = vld [vmem:[%s213 + $0x1d0] sm:$0xf]
        %v366 = vld [vmem:[%s213 + $0x1d4] sm:$0xf]
        %v367 = vld [vmem:[%s213 + $0x1d8] sm:$0xf]
        %v368 = vld [vmem:[%s213 + $0x1dc] sm:$0xf]
        %v369 = vld [vmem:[%s213 + $0x1e0] sm:$0xf]
        %v370 = vld [vmem:[%s213 + $0x1e4] sm:$0xf]
        %v371 = vld [vmem:[%s213 + $0x1e8] sm:$0xf]
        %v372 = vld [vmem:[%s213 + $0x1ec] sm:$0xf]
        %v373 = vld [vmem:[%s213 + $0x1f0] sm:$0xf]
        %v374 = vld [vmem:[%s213 + $0x1f4] sm:$0xf]
        %v375 = vld [vmem:[%s213 + $0x1f8] sm:$0xf]
        %v376 = vld [vmem:[%s213 + $0x1fc] sm:$0xf]
        %v377 = vld [vmem:[#allocation7] sm:$0xf]
        %v378 = vld [vmem:[#allocation7 + $0x4] sm:$0xf]
        %v379 = vld [vmem:[#allocation7 + $0x8] sm:$0xf]
        %v380 = vld [vmem:[#allocation7 + $0xc] sm:$0xf]
        %v381 = vld [vmem:[#allocation7 + $0x10] sm:$0xf]
        %v382 = vld [vmem:[#allocation7 + $0x14] sm:$0xf]
        %v383 = vld [vmem:[#allocation7 + $0x18] sm:$0xf]
        %v384 = vld [vmem:[#allocation7 + $0x1c] sm:$0xf]
        %v385 = vld [vmem:[#allocation7 + $0x20] sm:$0xf]
        %v386 = vld [vmem:[#allocation7 + $0x24] sm:$0xf]
        %v387 = vld [vmem:[#allocation7 + $0x28] sm:$0xf]
        %v388 = vld [vmem:[#allocation7 + $0x2c] sm:$0xf]
        %v389 = vld [vmem:[#allocation7 + $0x30] sm:$0xf]
        %v390 = vld [vmem:[#allocation7 + $0x34] sm:$0xf]
        %v391 = vld [vmem:[#allocation7 + $0x38] sm:$0xf]
        %v392 = vld [vmem:[#allocation7 + $0x3c] sm:$0xf]
        %v521 = vunpack.c.l.b16 %v249
        %v522 = vunpack.c.l.b16 %v250
        %v523 = vunpack.c.l.b16 %v251
        %v524 = vunpack.c.l.b16 %v252
        %v525 = vunpack.c.l.b16 %v253
        %v526 = vunpack.c.l.b16 %v254
        %v527 = vunpack.c.l.b16 %v255
        %v528 = vunpack.c.l.b16 %v256
        %v529 = vunpack.c.l.b16 %v257
        %v530 = vunpack.c.l.b16 %v258
        %v531 = vunpack.c.l.b16 %v259
        %v532 = vunpack.c.l.b16 %v260
        %v533 = vunpack.c.l.b16 %v261
        %v534 = vunpack.c.l.b16 %v262
        %v535 = vunpack.c.l.b16 %v263
        %v536 = vunpack.c.l.b16 %v264
        %v537 = vunpack.c.l.b16 %v265
        %v538 = vunpack.c.l.b16 %v266
        %v539 = vunpack.c.l.b16 %v267
        %v540 = vunpack.c.l.b16 %v268
        %v541 = vunpack.c.l.b16 %v269
        %v542 = vunpack.c.l.b16 %v270
        %v543 = vunpack.c.l.b16 %v271
        %v544 = vunpack.c.l.b16 %v272
        %v545 = vunpack.c.l.b16 %v273
        %v546 = vunpack.c.l.b16 %v274
        %v547 = vunpack.c.l.b16 %v275
        %v548 = vunpack.c.l.b16 %v276
        %v549 = vunpack.c.l.b16 %v277
        %v550 = vunpack.c.l.b16 %v278
        %v551 = vunpack.c.l.b16 %v279
        %v552 = vunpack.c.l.b16 %v280
        %v553 = vunpack.c.l.b16 %v281
        %v554 = vunpack.c.l.b16 %v282
        %v555 = vunpack.c.l.b16 %v283
        %v556 = vunpack.c.l.b16 %v284
        %v557 = vunpack.c.l.b16 %v285
        %v558 = vunpack.c.l.b16 %v286
        %v559 = vunpack.c.l.b16 %v287
        %v560 = vunpack.c.l.b16 %v288
        %v561 = vunpack.c.l.b16 %v289
        %v562 = vunpack.c.l.b16 %v290
        %v563 = vunpack.c.l.b16 %v291
        %v564 = vunpack.c.l.b16 %v292
        %v565 = vunpack.c.l.b16 %v293
        %v566 = vunpack.c.l.b16 %v294
        %v567 = vunpack.c.l.b16 %v295
        %v568 = vunpack.c.l.b16 %v296
        %v569 = vunpack.c.l.b16 %v297
        %v570 = vunpack.c.l.b16 %v298
        %v571 = vunpack.c.l.b16 %v299
        %v572 = vunpack.c.l.b16 %v300
        %v573 = vunpack.c.l.b16 %v301
        %v574 = vunpack.c.l.b16 %v302
        %v575 = vunpack.c.l.b16 %v303
        %v576 = vunpack.c.l.b16 %v304
        %v577 = vunpack.c.l.b16 %v305
        %v578 = vunpack.c.l.b16 %v306
        %v579 = vunpack.c.l.b16 %v307
        %v580 = vunpack.c.l.b16 %v308
        %v581 = vunpack.c.l.b16 %v309
        %v582 = vunpack.c.l.b16 %v310
        %v583 = vunpack.c.l.b16 %v311
        %v584 = vunpack.c.l.b16 %v312
        %v585 = vunpack.c.l.b16 %v313
        %v586 = vunpack.c.l.b16 %v314
        %v587 = vunpack.c.l.b16 %v315
        %v588 = vunpack.c.l.b16 %v316
        %v589 = vunpack.c.l.b16 %v317
        %v590 = vunpack.c.l.b16 %v318
        %v591 = vunpack.c.l.b16 %v319
        %v592 = vunpack.c.l.b16 %v320
        %v593 = vunpack.c.l.b16 %v321
        %v594 = vunpack.c.l.b16 %v322
        %v595 = vunpack.c.l.b16 %v323
        %v596 = vunpack.c.l.b16 %v324
        %v597 = vunpack.c.l.b16 %v325
        %v598 = vunpack.c.l.b16 %v326
        %v599 = vunpack.c.l.b16 %v327
        %v600 = vunpack.c.l.b16 %v328
        %v601 = vunpack.c.l.b16 %v329
        %v602 = vunpack.c.l.b16 %v330
        %v603 = vunpack.c.l.b16 %v331
        %v604 = vunpack.c.l.b16 %v332
        %v605 = vunpack.c.l.b16 %v333
        %v606 = vunpack.c.l.b16 %v334
        %v607 = vunpack.c.l.b16 %v335
        %v608 = vunpack.c.l.b16 %v336
        %v609 = vunpack.c.l.b16 %v337
        %v610 = vunpack.c.l.b16 %v338
        %v611 = vunpack.c.l.b16 %v339
        %v612 = vunpack.c.l.b16 %v340
        %v613 = vunpack.c.l.b16 %v341
        %v614 = vunpack.c.l.b16 %v342
        %v615 = vunpack.c.l.b16 %v343
        %v616 = vunpack.c.l.b16 %v344
        %v617 = vunpack.c.l.b16 %v345
        %v618 = vunpack.c.l.b16 %v346
        %v619 = vunpack.c.l.b16 %v347
        %v620 = vunpack.c.l.b16 %v348
        %v621 = vunpack.c.l.b16 %v349
        %v622 = vunpack.c.l.b16 %v350
        %v623 = vunpack.c.l.b16 %v351
        %v624 = vunpack.c.l.b16 %v352
        %v625 = vunpack.c.l.b16 %v353
        %v626 = vunpack.c.l.b16 %v354
        %v627 = vunpack.c.l.b16 %v355
        %v628 = vunpack.c.l.b16 %v356
        %v629 = vunpack.c.l.b16 %v357
        %v630 = vunpack.c.l.b16 %v358
        %v631 = vunpack.c.l.b16 %v359
        %v632 = vunpack.c.l.b16 %v360
        %v633 = vunpack.c.l.b16 %v361
        %v634 = vunpack.c.l.b16 %v362
        %v635 = vunpack.c.l.b16 %v363
        %v636 = vunpack.c.l.b16 %v364
        %v637 = vunpack.c.l.b16 %v365
        %v638 = vunpack.c.l.b16 %v366
        %v639 = vunpack.c.l.b16 %v367
        %v640 = vunpack.c.l.b16 %v368
        %v641 = vunpack.c.l.b16 %v369
        %v642 = vunpack.c.l.b16 %v370
        %v643 = vunpack.c.l.b16 %v371
        %v644 = vunpack.c.l.b16 %v372
        %v645 = vunpack.c.l.b16 %v373
        %v646 = vunpack.c.l.b16 %v374
        %v647 = vunpack.c.l.b16 %v375
        %v648 = vunpack.c.l.b16 %v376
        %v649 = vpack.c.b16 %v522, %v521
        %v650 = vpack.c.b16 %v524, %v523
        %v651 = vpack.c.b16 %v526, %v525
        %v652 = vpack.c.b16 %v528, %v527
        %v653 = vpack.c.b16 %v530, %v529
        %v654 = vpack.c.b16 %v532, %v531
        %v655 = vpack.c.b16 %v534, %v533
        %v656 = vpack.c.b16 %v536, %v535
        %v657 = vpack.c.b16 %v538, %v537
        %v658 = vpack.c.b16 %v540, %v539
        %v659 = vpack.c.b16 %v542, %v541
        %v660 = vpack.c.b16 %v544, %v543
        %v661 = vpack.c.b16 %v546, %v545
        %v662 = vpack.c.b16 %v548, %v547
        %v663 = vpack.c.b16 %v550, %v549
        %v664 = vpack.c.b16 %v552, %v551
        %v665 = vpack.c.b16 %v554, %v553
        %v666 = vpack.c.b16 %v556, %v555
        %v667 = vpack.c.b16 %v558, %v557
        %v668 = vpack.c.b16 %v560, %v559
        %v669 = vpack.c.b16 %v562, %v561
        %v670 = vpack.c.b16 %v564, %v563
        %v671 = vpack.c.b16 %v566, %v565
        %v672 = vpack.c.b16 %v568, %v567
        %v673 = vpack.c.b16 %v570, %v569
        %v674 = vpack.c.b16 %v572, %v571
        %v675 = vpack.c.b16 %v574, %v573
        %v676 = vpack.c.b16 %v576, %v575
        %v677 = vpack.c.b16 %v578, %v577
        %v678 = vpack.c.b16 %v580, %v579
        %v679 = vpack.c.b16 %v582, %v581
        %v680 = vpack.c.b16 %v584, %v583
        %v681 = vpack.c.b16 %v586, %v585
        %v682 = vpack.c.b16 %v588, %v587
        %v683 = vpack.c.b16 %v590, %v589
        %v684 = vpack.c.b16 %v592, %v591
        %v685 = vpack.c.b16 %v594, %v593
        %v686 = vpack.c.b16 %v596, %v595
        %v687 = vpack.c.b16 %v598, %v597
        %v688 = vpack.c.b16 %v600, %v599
        %v689 = vpack.c.b16 %v602, %v601
        %v690 = vpack.c.b16 %v604, %v603
        %v691 = vpack.c.b16 %v606, %v605
        %v692 = vpack.c.b16 %v608, %v607
        %v693 = vpack.c.b16 %v610, %v609
        %v694 = vpack.c.b16 %v612, %v611
        %v695 = vpack.c.b16 %v614, %v613
        %v696 = vpack.c.b16 %v616, %v615
        %v697 = vpack.c.b16 %v618, %v617
        %v698 = vpack.c.b16 %v620, %v619
        %v699 = vpack.c.b16 %v622, %v621
        %v700 = vpack.c.b16 %v624, %v623
        %v701 = vpack.c.b16 %v626, %v625
        %v702 = vpack.c.b16 %v628, %v627
        %v703 = vpack.c.b16 %v630, %v629
        %v704 = vpack.c.b16 %v632, %v631
        %v705 = vpack.c.b16 %v634, %v633
        %v706 = vpack.c.b16 %v636, %v635
        %v707 = vpack.c.b16 %v638, %v637
        %v708 = vpack.c.b16 %v640, %v639
        %v709 = vpack.c.b16 %v642, %v641
        %v710 = vpack.c.b16 %v644, %v643
        %v711 = vpack.c.b16 %v646, %v645
        %v712 = vpack.c.b16 %v648, %v647
        %v793 = vunpack.c.l.b16 %v377
        %v794 = vunpack.c.l.b16 %v378
        %v795 = vunpack.c.l.b16 %v379
        %v796 = vunpack.c.l.b16 %v380
        %v797 = vunpack.c.l.b16 %v381
        %v798 = vunpack.c.l.b16 %v382
        %v799 = vunpack.c.l.b16 %v383
        %v800 = vunpack.c.l.b16 %v384
        %v801 = vunpack.c.l.b16 %v385
        %v802 = vunpack.c.l.b16 %v386
        %v803 = vunpack.c.l.b16 %v387
        %v804 = vunpack.c.l.b16 %v388
        %v805 = vunpack.c.l.b16 %v389
        %v806 = vunpack.c.l.b16 %v390
        %v807 = vunpack.c.l.b16 %v391
        %v808 = vunpack.c.l.b16 %v392
        %v809 = vpack.c.b16 %v794, %v793
        %v810 = vpack.c.b16 %v796, %v795
        %v811 = vpack.c.b16 %v798, %v797
        %v812 = vpack.c.b16 %v800, %v799
        %v813 = vpack.c.b16 %v802, %v801
        %v814 = vpack.c.b16 %v804, %v803
        %v815 = vpack.c.b16 %v806, %v805
        %v816 = vpack.c.b16 %v808, %v807
        %825 = vmatprep.subr.bf16.mxu0 0
        %826 = vmatpush1.bf16.msra.mxu0 %v816
        %827 = vmatprep.subr.bf16.mxu0 0
        %828 = vmatpush1.bf16.msra.mxu0 %v815
        %829 = vmatprep.subr.bf16.mxu0 0
        %830 = vmatpush1.bf16.msra.mxu0 %v814
        %831 = vmatprep.subr.bf16.mxu0 0
        %832 = vmatpush1.bf16.msra.mxu0 %v813
        %833 = vmatprep.subr.bf16.mxu0 0
        %834 = vmatpush1.bf16.msra.mxu0 %v812
        %835 = vmatprep.subr.bf16.mxu0 0
        %836 = vmatpush1.bf16.msra.mxu0 %v811
        %837 = vmatprep.subr.bf16.mxu0 0
        %838 = vmatpush1.bf16.msra.mxu0 %v810
        %839 = vmatprep.subr.bf16.mxu0 0
        %840 = vmatpush1.bf16.msra.mxu0 %v809
        %841 = vmatprep.subr.bf16.mxu0 0
        %842 = vmatpush2.bf16.msra.mxu0 0
        %843 = vmatprep.subr.bf16.mxu0 0
        %844 = vmatpush2.bf16.msra.mxu0 0
        %845 = vmatprep.subr.bf16.mxu0 0
        %846 = vmatpush2.bf16.msra.mxu0 0
        %847 = vmatprep.subr.bf16.mxu0 0
        %848 = vmatpush2.bf16.msra.mxu0 0
        %849 = vmatprep.subr.bf16.mxu0 0
        %850 = vmatpush2.bf16.msra.mxu0 0
        %851 = vmatprep.subr.bf16.mxu0 0
        %852 = vmatpush2.bf16.msra.mxu0 0
        %853 = vmatprep.subr.bf16.mxu0 0
        %854 = vmatpush2.bf16.msra.mxu0 0
        %855 = vmatprep.subr.bf16.mxu0 0
        %856 = vmatpush2.bf16.msra.mxu0 0
        %857 = vmatprep.mubr.bf16.mxu0 0
        %858 = vmatmul.mubr.bf16.gmra.mxu0 %v649
        %v859 = vpop.f32.mrf.mxu0
        %v860 = vadd.f32 0.0, %v859
        %v861 = vpop.f32.mrf.mxu0
        %v862 = vpop.f32.mrf.mxu0
        %v863 = vadd.f32 0.0, %v862
        %v864 = vpop.f32.mrf.mxu0
        %865 = vmatprep.mubr.bf16.mxu0 0
        %866 = vmatmul.mubr.bf16.gmra.mxu0 %v650
        %v867 = vpop.f32.mrf.mxu0
        %v868 = vadd.f32 0.0, %v867
        %v869 = vpop.f32.mrf.mxu0
        %v870 = vpop.f32.mrf.mxu0
        %v871 = vadd.f32 0.0, %v870
        %v872 = vpop.f32.mrf.mxu0
        %873 = vmatprep.mubr.bf16.mxu0 0
        %874 = vmatmul.mubr.bf16.gmra.mxu0 %v651
        %v875 = vpop.f32.mrf.mxu0
        %v876 = vadd.f32 0.0, %v875
        %v877 = vpop.f32.mrf.mxu0
        %v878 = vpop.f32.mrf.mxu0
        %v879 = vadd.f32 0.0, %v878
        %v880 = vpop.f32.mrf.mxu0
        %881 = vmatprep.mubr.bf16.mxu0 0
        %882 = vmatmul.mubr.bf16.gmra.mxu0 %v652
        %v883 = vpop.f32.mrf.mxu0
        %v884 = vadd.f32 0.0, %v883
        %v885 = vpop.f32.mrf.mxu0
        %v886 = vpop.f32.mrf.mxu0
        %v887 = vadd.f32 0.0, %v886
        %v888 = vpop.f32.mrf.mxu0
        %889 = vmatprep.mubr.bf16.mxu0 0
        %890 = vmatmul.mubr.bf16.gmra.mxu0 %v653
        %v891 = vpop.f32.mrf.mxu0
        %v892 = vadd.f32 0.0, %v891
        %v893 = vpop.f32.mrf.mxu0
        %v894 = vpop.f32.mrf.mxu0
        %v895 = vadd.f32 0.0, %v894
        %v896 = vpop.f32.mrf.mxu0
        %897 = vmatprep.mubr.bf16.mxu0 0
        %898 = vmatmul.mubr.bf16.gmra.mxu0 %v654
        %v899 = vpop.f32.mrf.mxu0
        %v900 = vadd.f32 0.0, %v899
        %v901 = vpop.f32.mrf.mxu0
        %v902 = vpop.f32.mrf.mxu0
        %v903 = vadd.f32 0.0, %v902
        %v904 = vpop.f32.mrf.mxu0
        %905 = vmatprep.mubr.bf16.mxu0 0
        %906 = vmatmul.mubr.bf16.gmra.mxu0 %v655
        %v907 = vpop.f32.mrf.mxu0
        %v908 = vadd.f32 0.0, %v907
        %v909 = vpop.f32.mrf.mxu0
        %v910 = vpop.f32.mrf.mxu0
        %v911 = vadd.f32 0.0, %v910
        %v912 = vpop.f32.mrf.mxu0
        %913 = vmatprep.mubr.bf16.mxu0 0
        %914 = vmatmul.mubr.bf16.gmra.mxu0 %v656
        %v915 = vpop.f32.mrf.mxu0
        %v916 = vadd.f32 0.0, %v915
        %v917 = vpop.f32.mrf.mxu0
        %v918 = vpop.f32.mrf.mxu0
        %v919 = vadd.f32 0.0, %v918
        %v920 = vpop.f32.mrf.mxu0
        %921 = vmatprep.mubr.bf16.mxu0 0
        %922 = vmatmul.mubr.bf16.gmra.mxu0 %v657
        %v923 = vpop.f32.mrf.mxu0
        %v924 = vadd.f32 0.0, %v923
        %v925 = vpop.f32.mrf.mxu0
        %v926 = vpop.f32.mrf.mxu0
        %v927 = vadd.f32 0.0, %v926
        %v928 = vpop.f32.mrf.mxu0
        %929 = vmatprep.mubr.bf16.mxu0 0
        %930 = vmatmul.mubr.bf16.gmra.mxu0 %v658
        %v931 = vpop.f32.mrf.mxu0
        %v932 = vadd.f32 0.0, %v931
        %v933 = vpop.f32.mrf.mxu0
        %v934 = vpop.f32.mrf.mxu0
        %v935 = vadd.f32 0.0, %v934
        %v936 = vpop.f32.mrf.mxu0
        %937 = vmatprep.mubr.bf16.mxu0 0
        %938 = vmatmul.mubr.bf16.gmra.mxu0 %v659
        %v939 = vpop.f32.mrf.mxu0
        %v940 = vadd.f32 0.0, %v939
        %v941 = vpop.f32.mrf.mxu0
        %v942 = vpop.f32.mrf.mxu0
        %v943 = vadd.f32 0.0, %v942
        %v944 = vpop.f32.mrf.mxu0
        %945 = vmatprep.mubr.bf16.mxu0 0
        %946 = vmatmul.mubr.bf16.gmra.mxu0 %v660
        %v947 = vpop.f32.mrf.mxu0
        %v948 = vadd.f32 0.0, %v947
        %v949 = vpop.f32.mrf.mxu0
        %v950 = vpop.f32.mrf.mxu0
        %v951 = vadd.f32 0.0, %v950
        %v952 = vpop.f32.mrf.mxu0
        %953 = vmatprep.mubr.bf16.mxu0 0
        %954 = vmatmul.mubr.bf16.gmra.mxu0 %v661
        %v955 = vpop.f32.mrf.mxu0
        %v956 = vadd.f32 0.0, %v955
        %v957 = vpop.f32.mrf.mxu0
        %v958 = vpop.f32.mrf.mxu0
        %v959 = vadd.f32 0.0, %v958
        %v960 = vpop.f32.mrf.mxu0
        %961 = vmatprep.mubr.bf16.mxu0 0
        %962 = vmatmul.mubr.bf16.gmra.mxu0 %v662
        %v963 = vpop.f32.mrf.mxu0
        %v964 = vadd.f32 0.0, %v963
        %v965 = vpop.f32.mrf.mxu0
        %v966 = vpop.f32.mrf.mxu0
        %v967 = vadd.f32 0.0, %v966
        %v968 = vpop.f32.mrf.mxu0
        %969 = vmatprep.mubr.bf16.mxu0 0
        %970 = vmatmul.mubr.bf16.gmra.mxu0 %v663
        %v971 = vpop.f32.mrf.mxu0
        %v972 = vadd.f32 0.0, %v971
        %v973 = vpop.f32.mrf.mxu0
        %v974 = vpop.f32.mrf.mxu0
        %v975 = vadd.f32 0.0, %v974
        %v976 = vpop.f32.mrf.mxu0
        %977 = vmatprep.mubr.bf16.mxu0 0
        %978 = vmatmul.mubr.bf16.gmra.mxu0 %v664
        %v979 = vpop.f32.mrf.mxu0
        %v980 = vadd.f32 0.0, %v979
        %v981 = vpop.f32.mrf.mxu0
        %v982 = vpop.f32.mrf.mxu0
        %v983 = vadd.f32 0.0, %v982
        %v984 = vpop.f32.mrf.mxu0
        %985 = vmatprep.mubr.bf16.mxu0 0
        %986 = vmatmul.mubr.bf16.gmra.mxu0 %v665
        %v987 = vpop.f32.mrf.mxu0
        %v988 = vadd.f32 0.0, %v987
        %v989 = vpop.f32.mrf.mxu0
        %v990 = vpop.f32.mrf.mxu0
        %v991 = vadd.f32 0.0, %v990
        %v992 = vpop.f32.mrf.mxu0
        %993 = vmatprep.mubr.bf16.mxu0 0
        %994 = vmatmul.mubr.bf16.gmra.mxu0 %v666
        %v995 = vpop.f32.mrf.mxu0
        %v996 = vadd.f32 0.0, %v995
        %v997 = vpop.f32.mrf.mxu0
        %v998 = vpop.f32.mrf.mxu0
        %v999 = vadd.f32 0.0, %v998
        %v1000 = vpop.f32.mrf.mxu0
        %1001 = vmatprep.mubr.bf16.mxu0 0
        %1002 = vmatmul.mubr.bf16.gmra.mxu0 %v667
        %v1003 = vpop.f32.mrf.mxu0
        %v1004 = vadd.f32 0.0, %v1003
        %v1005 = vpop.f32.mrf.mxu0
        %v1006 = vpop.f32.mrf.mxu0
        %v1007 = vadd.f32 0.0, %v1006
        %v1008 = vpop.f32.mrf.mxu0
        %1009 = vmatprep.mubr.bf16.mxu0 0
        %1010 = vmatmul.mubr.bf16.gmra.mxu0 %v668
        %v1011 = vpop.f32.mrf.mxu0
        %v1012 = vadd.f32 0.0, %v1011
        %v1013 = vpop.f32.mrf.mxu0
        %v1014 = vpop.f32.mrf.mxu0
        %v1015 = vadd.f32 0.0, %v1014
        %v1016 = vpop.f32.mrf.mxu0
        %1017 = vmatprep.mubr.bf16.mxu0 0
        %1018 = vmatmul.mubr.bf16.gmra.mxu0 %v669
        %v1019 = vpop.f32.mrf.mxu0
        %v1020 = vadd.f32 0.0, %v1019
        %v1021 = vpop.f32.mrf.mxu0
        %v1022 = vpop.f32.mrf.mxu0
        %v1023 = vadd.f32 0.0, %v1022
        %v1024 = vpop.f32.mrf.mxu0
        %1025 = vmatprep.mubr.bf16.mxu0 0
        %1026 = vmatmul.mubr.bf16.gmra.mxu0 %v670
        %v1027 = vpop.f32.mrf.mxu0
        %v1028 = vadd.f32 0.0, %v1027
        %v1029 = vpop.f32.mrf.mxu0
        %v1030 = vpop.f32.mrf.mxu0
        %v1031 = vadd.f32 0.0, %v1030
        %v1032 = vpop.f32.mrf.mxu0
        %1033 = vmatprep.mubr.bf16.mxu0 0
        %1034 = vmatmul.mubr.bf16.gmra.mxu0 %v671
        %v1035 = vpop.f32.mrf.mxu0
        %v1036 = vadd.f32 0.0, %v1035
        %v1037 = vpop.f32.mrf.mxu0
        %v1038 = vpop.f32.mrf.mxu0
        %v1039 = vadd.f32 0.0, %v1038
        %v1040 = vpop.f32.mrf.mxu0
        %1041 = vmatprep.mubr.bf16.mxu0 0
        %1042 = vmatmul.mubr.bf16.gmra.mxu0 %v672
        %v1043 = vpop.f32.mrf.mxu0
        %v1044 = vadd.f32 0.0, %v1043
        %v1045 = vpop.f32.mrf.mxu0
        %v1046 = vpop.f32.mrf.mxu0
        %v1047 = vadd.f32 0.0, %v1046
        %v1048 = vpop.f32.mrf.mxu0
        %1049 = vmatprep.mubr.bf16.mxu0 0
        %1050 = vmatmul.mubr.bf16.gmra.mxu0 %v673
        %v1051 = vpop.f32.mrf.mxu0
        %v1052 = vadd.f32 0.0, %v1051
        %v1053 = vpop.f32.mrf.mxu0
        %v1054 = vpop.f32.mrf.mxu0
        %v1055 = vadd.f32 0.0, %v1054
        %v1056 = vpop.f32.mrf.mxu0
        %1057 = vmatprep.mubr.bf16.mxu0 0
        %1058 = vmatmul.mubr.bf16.gmra.mxu0 %v674
        %v1059 = vpop.f32.mrf.mxu0
        %v1060 = vadd.f32 0.0, %v1059
        %v1061 = vpop.f32.mrf.mxu0
        %v1062 = vpop.f32.mrf.mxu0
        %v1063 = vadd.f32 0.0, %v1062
        %v1064 = vpop.f32.mrf.mxu0
        %1065 = vmatprep.mubr.bf16.mxu0 0
        %1066 = vmatmul.mubr.bf16.gmra.mxu0 %v675
        %v1067 = vpop.f32.mrf.mxu0
        %v1068 = vadd.f32 0.0, %v1067
        %v1069 = vpop.f32.mrf.mxu0
        %v1070 = vpop.f32.mrf.mxu0
        %v1071 = vadd.f32 0.0, %v1070
        %v1072 = vpop.f32.mrf.mxu0
        %1073 = vmatprep.mubr.bf16.mxu0 0
        %1074 = vmatmul.mubr.bf16.gmra.mxu0 %v676
        %v1075 = vpop.f32.mrf.mxu0
        %v1076 = vadd.f32 0.0, %v1075
        %v1077 = vpop.f32.mrf.mxu0
        %v1078 = vpop.f32.mrf.mxu0
        %v1079 = vadd.f32 0.0, %v1078
        %v1080 = vpop.f32.mrf.mxu0
        %1081 = vmatprep.mubr.bf16.mxu0 0
        %1082 = vmatmul.mubr.bf16.gmra.mxu0 %v677
        %v1083 = vpop.f32.mrf.mxu0
        %v1084 = vadd.f32 0.0, %v1083
        %v1085 = vpop.f32.mrf.mxu0
        %v1086 = vpop.f32.mrf.mxu0
        %v1087 = vadd.f32 0.0, %v1086
        %v1088 = vpop.f32.mrf.mxu0
        %1089 = vmatprep.mubr.bf16.mxu0 0
        %1090 = vmatmul.mubr.bf16.gmra.mxu0 %v678
        %v1091 = vpop.f32.mrf.mxu0
        %v1092 = vadd.f32 0.0, %v1091
        %v1093 = vpop.f32.mrf.mxu0
        %v1094 = vpop.f32.mrf.mxu0
        %v1095 = vadd.f32 0.0, %v1094
        %v1096 = vpop.f32.mrf.mxu0
        %1097 = vmatprep.mubr.bf16.mxu0 0
        %1098 = vmatmul.mubr.bf16.gmra.mxu0 %v679
        %v1099 = vpop.f32.mrf.mxu0
        %v1100 = vadd.f32 0.0, %v1099
        %v1101 = vpop.f32.mrf.mxu0
        %v1102 = vpop.f32.mrf.mxu0
        %v1103 = vadd.f32 0.0, %v1102
        %v1104 = vpop.f32.mrf.mxu0
        %1105 = vmatprep.mubr.bf16.mxu0 0
        %1106 = vmatmul.mubr.bf16.gmra.mxu0 %v680
        %v1107 = vpop.f32.mrf.mxu0
        %v1108 = vadd.f32 0.0, %v1107
        %v1109 = vpop.f32.mrf.mxu0
        %v1110 = vpop.f32.mrf.mxu0
        %v1111 = vadd.f32 0.0, %v1110
        %v1112 = vpop.f32.mrf.mxu0
        %1113 = vmatprep.mubr.bf16.mxu0 0
        %1114 = vmatmul.mubr.bf16.gmra.mxu0 %v681
        %v1115 = vpop.f32.mrf.mxu0
        %v1116 = vadd.f32 0.0, %v1115
        %v1117 = vpop.f32.mrf.mxu0
        %v1118 = vpop.f32.mrf.mxu0
        %v1119 = vadd.f32 0.0, %v1118
        %v1120 = vpop.f32.mrf.mxu0
        %1121 = vmatprep.mubr.bf16.mxu0 0
        %1122 = vmatmul.mubr.bf16.gmra.mxu0 %v682
        %v1123 = vpop.f32.mrf.mxu0
        %v1124 = vadd.f32 0.0, %v1123
        %v1125 = vpop.f32.mrf.mxu0
        %v1126 = vpop.f32.mrf.mxu0
        %v1127 = vadd.f32 0.0, %v1126
        %v1128 = vpop.f32.mrf.mxu0
        %1129 = vmatprep.mubr.bf16.mxu0 0
        %1130 = vmatmul.mubr.bf16.gmra.mxu0 %v683
        %v1131 = vpop.f32.mrf.mxu0
        %v1132 = vadd.f32 0.0, %v1131
        %v1133 = vpop.f32.mrf.mxu0
        %v1134 = vpop.f32.mrf.mxu0
        %v1135 = vadd.f32 0.0, %v1134
        %v1136 = vpop.f32.mrf.mxu0
        %1137 = vmatprep.mubr.bf16.mxu0 0
        %1138 = vmatmul.mubr.bf16.gmra.mxu0 %v684
        %v1139 = vpop.f32.mrf.mxu0
        %v1140 = vadd.f32 0.0, %v1139
        %v1141 = vpop.f32.mrf.mxu0
        %v1142 = vpop.f32.mrf.mxu0
        %v1143 = vadd.f32 0.0, %v1142
        %v1144 = vpop.f32.mrf.mxu0
        %1145 = vmatprep.mubr.bf16.mxu0 0
        %1146 = vmatmul.mubr.bf16.gmra.mxu0 %v685
        %v1147 = vpop.f32.mrf.mxu0
        %v1148 = vadd.f32 0.0, %v1147
        %v1149 = vpop.f32.mrf.mxu0
        %v1150 = vpop.f32.mrf.mxu0
        %v1151 = vadd.f32 0.0, %v1150
        %v1152 = vpop.f32.mrf.mxu0
        %1153 = vmatprep.mubr.bf16.mxu0 0
        %1154 = vmatmul.mubr.bf16.gmra.mxu0 %v686
        %v1155 = vpop.f32.mrf.mxu0
        %v1156 = vadd.f32 0.0, %v1155
        %v1157 = vpop.f32.mrf.mxu0
        %v1158 = vpop.f32.mrf.mxu0
        %v1159 = vadd.f32 0.0, %v1158
        %v1160 = vpop.f32.mrf.mxu0
        %1161 = vmatprep.mubr.bf16.mxu0 0
        %1162 = vmatmul.mubr.bf16.gmra.mxu0 %v687
        %v1163 = vpop.f32.mrf.mxu0
        %v1164 = vadd.f32 0.0, %v1163
        %v1165 = vpop.f32.mrf.mxu0
        %v1166 = vpop.f32.mrf.mxu0
        %v1167 = vadd.f32 0.0, %v1166
        %v1168 = vpop.f32.mrf.mxu0
        %1169 = vmatprep.mubr.bf16.mxu0 0
        %1170 = vmatmul.mubr.bf16.gmra.mxu0 %v688
        %v1171 = vpop.f32.mrf.mxu0
        %v1172 = vadd.f32 0.0, %v1171
        %v1173 = vpop.f32.mrf.mxu0
        %v1174 = vpop.f32.mrf.mxu0
        %v1175 = vadd.f32 0.0, %v1174
        %v1176 = vpop.f32.mrf.mxu0
        %1177 = vmatprep.mubr.bf16.mxu0 0
        %1178 = vmatmul.mubr.bf16.gmra.mxu0 %v689
        %v1179 = vpop.f32.mrf.mxu0
        %v1180 = vadd.f32 0.0, %v1179
        %v1181 = vpop.f32.mrf.mxu0
        %v1182 = vpop.f32.mrf.mxu0
        %v1183 = vadd.f32 0.0, %v1182
        %v1184 = vpop.f32.mrf.mxu0
        %1185 = vmatprep.mubr.bf16.mxu0 0
        %1186 = vmatmul.mubr.bf16.gmra.mxu0 %v690
        %v1187 = vpop.f32.mrf.mxu0
        %v1188 = vadd.f32 0.0, %v1187
        %v1189 = vpop.f32.mrf.mxu0
        %v1190 = vpop.f32.mrf.mxu0
        %v1191 = vadd.f32 0.0, %v1190
        %v1192 = vpop.f32.mrf.mxu0
        %1193 = vmatprep.mubr.bf16.mxu0 0
        %1194 = vmatmul.mubr.bf16.gmra.mxu0 %v691
        %v1195 = vpop.f32.mrf.mxu0
        %v1196 = vadd.f32 0.0, %v1195
        %v1197 = vpop.f32.mrf.mxu0
        %v1198 = vpop.f32.mrf.mxu0
        %v1199 = vadd.f32 0.0, %v1198
        %v1200 = vpop.f32.mrf.mxu0
        %1201 = vmatprep.mubr.bf16.mxu0 0
        %1202 = vmatmul.mubr.bf16.gmra.mxu0 %v692
        %v1203 = vpop.f32.mrf.mxu0
        %v1204 = vadd.f32 0.0, %v1203
        %v1205 = vpop.f32.mrf.mxu0
        %v1206 = vpop.f32.mrf.mxu0
        %v1207 = vadd.f32 0.0, %v1206
        %v1208 = vpop.f32.mrf.mxu0
        %1209 = vmatprep.mubr.bf16.mxu0 0
        %1210 = vmatmul.mubr.bf16.gmra.mxu0 %v693
        %v1211 = vpop.f32.mrf.mxu0
        %v1212 = vadd.f32 0.0, %v1211
        %v1213 = vpop.f32.mrf.mxu0
        %v1214 = vpop.f32.mrf.mxu0
        %v1215 = vadd.f32 0.0, %v1214
        %v1216 = vpop.f32.mrf.mxu0
        %1217 = vmatprep.mubr.bf16.mxu0 0
        %1218 = vmatmul.mubr.bf16.gmra.mxu0 %v694
        %v1219 = vpop.f32.mrf.mxu0
        %v1220 = vadd.f32 0.0, %v1219
        %v1221 = vpop.f32.mrf.mxu0
        %v1222 = vpop.f32.mrf.mxu0
        %v1223 = vadd.f32 0.0, %v1222
        %v1224 = vpop.f32.mrf.mxu0
        %1225 = vmatprep.mubr.bf16.mxu0 0
        %1226 = vmatmul.mubr.bf16.gmra.mxu0 %v695
        %v1227 = vpop.f32.mrf.mxu0
        %v1228 = vadd.f32 0.0, %v1227
        %v1229 = vpop.f32.mrf.mxu0
        %v1230 = vpop.f32.mrf.mxu0
        %v1231 = vadd.f32 0.0, %v1230
        %v1232 = vpop.f32.mrf.mxu0
        %1233 = vmatprep.mubr.bf16.mxu0 0
        %1234 = vmatmul.mubr.bf16.gmra.mxu0 %v696
        %v1235 = vpop.f32.mrf.mxu0
        %v1236 = vadd.f32 0.0, %v1235
        %v1237 = vpop.f32.mrf.mxu0
        %v1238 = vpop.f32.mrf.mxu0
        %v1239 = vadd.f32 0.0, %v1238
        %v1240 = vpop.f32.mrf.mxu0
        %1241 = vmatprep.mubr.bf16.mxu0 0
        %1242 = vmatmul.mubr.bf16.gmra.mxu0 %v697
        %v1243 = vpop.f32.mrf.mxu0
        %v1244 = vadd.f32 0.0, %v1243
        %v1245 = vpop.f32.mrf.mxu0
        %v1246 = vpop.f32.mrf.mxu0
        %v1247 = vadd.f32 0.0, %v1246
        %v1248 = vpop.f32.mrf.mxu0
        %1249 = vmatprep.mubr.bf16.mxu0 0
        %1250 = vmatmul.mubr.bf16.gmra.mxu0 %v698
        %v1251 = vpop.f32.mrf.mxu0
        %v1252 = vadd.f32 0.0, %v1251
        %v1253 = vpop.f32.mrf.mxu0
        %v1254 = vpop.f32.mrf.mxu0
        %v1255 = vadd.f32 0.0, %v1254
        %v1256 = vpop.f32.mrf.mxu0
        %1257 = vmatprep.mubr.bf16.mxu0 0
        %1258 = vmatmul.mubr.bf16.gmra.mxu0 %v699
        %v1259 = vpop.f32.mrf.mxu0
        %v1260 = vadd.f32 0.0, %v1259
        %v1261 = vpop.f32.mrf.mxu0
        %v1262 = vpop.f32.mrf.mxu0
        %v1263 = vadd.f32 0.0, %v1262
        %v1264 = vpop.f32.mrf.mxu0
        %1265 = vmatprep.mubr.bf16.mxu0 0
        %1266 = vmatmul.mubr.bf16.gmra.mxu0 %v700
        %v1267 = vpop.f32.mrf.mxu0
        %v1268 = vadd.f32 0.0, %v1267
        %v1269 = vpop.f32.mrf.mxu0
        %v1270 = vpop.f32.mrf.mxu0
        %v1271 = vadd.f32 0.0, %v1270
        %v1272 = vpop.f32.mrf.mxu0
        %1273 = vmatprep.mubr.bf16.mxu0 0
        %1274 = vmatmul.mubr.bf16.gmra.mxu0 %v701
        %v1275 = vpop.f32.mrf.mxu0
        %v1276 = vadd.f32 0.0, %v1275
        %v1277 = vpop.f32.mrf.mxu0
        %v1278 = vpop.f32.mrf.mxu0
        %v1279 = vadd.f32 0.0, %v1278
        %v1280 = vpop.f32.mrf.mxu0
        %1281 = vmatprep.mubr.bf16.mxu0 0
        %1282 = vmatmul.mubr.bf16.gmra.mxu0 %v702
        %v1283 = vpop.f32.mrf.mxu0
        %v1284 = vadd.f32 0.0, %v1283
        %v1285 = vpop.f32.mrf.mxu0
        %v1286 = vpop.f32.mrf.mxu0
        %v1287 = vadd.f32 0.0, %v1286
        %v1288 = vpop.f32.mrf.mxu0
        %1289 = vmatprep.mubr.bf16.mxu0 0
        %1290 = vmatmul.mubr.bf16.gmra.mxu0 %v703
        %v1291 = vpop.f32.mrf.mxu0
        %v1292 = vadd.f32 0.0, %v1291
        %v1293 = vpop.f32.mrf.mxu0
        %v1294 = vpop.f32.mrf.mxu0
        %v1295 = vadd.f32 0.0, %v1294
        %v1296 = vpop.f32.mrf.mxu0
        %1297 = vmatprep.mubr.bf16.mxu0 0
        %1298 = vmatmul.mubr.bf16.gmra.mxu0 %v704
        %v1299 = vpop.f32.mrf.mxu0
        %v1300 = vadd.f32 0.0, %v1299
        %v1301 = vpop.f32.mrf.mxu0
        %v1302 = vpop.f32.mrf.mxu0
        %v1303 = vadd.f32 0.0, %v1302
        %v1304 = vpop.f32.mrf.mxu0
        %1305 = vmatprep.mubr.bf16.mxu0 0
        %1306 = vmatmul.mubr.bf16.gmra.mxu0 %v705
        %v1307 = vpop.f32.mrf.mxu0
        %v1308 = vadd.f32 0.0, %v1307
        %v1309 = vpop.f32.mrf.mxu0
        %v1310 = vpop.f32.mrf.mxu0
        %v1311 = vadd.f32 0.0, %v1310
        %v1312 = vpop.f32.mrf.mxu0
        %1313 = vmatprep.mubr.bf16.mxu0 0
        %1314 = vmatmul.mubr.bf16.gmra.mxu0 %v706
        %v1315 = vpop.f32.mrf.mxu0
        %v1316 = vadd.f32 0.0, %v1315
        %v1317 = vpop.f32.mrf.mxu0
        %v1318 = vpop.f32.mrf.mxu0
        %v1319 = vadd.f32 0.0, %v1318
        %v1320 = vpop.f32.mrf.mxu0
        %1321 = vmatprep.mubr.bf16.mxu0 0
        %1322 = vmatmul.mubr.bf16.gmra.mxu0 %v707
        %v1323 = vpop.f32.mrf.mxu0
        %v1324 = vadd.f32 0.0, %v1323
        %v1325 = vpop.f32.mrf.mxu0
        %v1326 = vpop.f32.mrf.mxu0
        %v1327 = vadd.f32 0.0, %v1326
        %v1328 = vpop.f32.mrf.mxu0
        %1329 = vmatprep.mubr.bf16.mxu0 0
        %1330 = vmatmul.mubr.bf16.gmra.mxu0 %v708
        %v1331 = vpop.f32.mrf.mxu0
        %v1332 = vadd.f32 0.0, %v1331
        %v1333 = vpop.f32.mrf.mxu0
        %v1334 = vpop.f32.mrf.mxu0
        %v1335 = vadd.f32 0.0, %v1334
        %v1336 = vpop.f32.mrf.mxu0
        %1337 = vmatprep.mubr.bf16.mxu0 0
        %1338 = vmatmul.mubr.bf16.gmra.mxu0 %v709
        %v1339 = vpop.f32.mrf.mxu0
        %v1340 = vadd.f32 0.0, %v1339
        %v1341 = vpop.f32.mrf.mxu0
        %v1342 = vpop.f32.mrf.mxu0
        %v1343 = vadd.f32 0.0, %v1342
        %v1344 = vpop.f32.mrf.mxu0
        %1345 = vmatprep.mubr.bf16.mxu0 0
        %1346 = vmatmul.mubr.bf16.gmra.mxu0 %v710
        %v1347 = vpop.f32.mrf.mxu0
        %v1348 = vadd.f32 0.0, %v1347
        %v1349 = vpop.f32.mrf.mxu0
        %v1350 = vpop.f32.mrf.mxu0
        %v1351 = vadd.f32 0.0, %v1350
        %v1352 = vpop.f32.mrf.mxu0
        %1353 = vmatprep.mubr.bf16.mxu0 0
        %1354 = vmatmul.mubr.bf16.gmra.mxu0 %v711
        %v1355 = vpop.f32.mrf.mxu0
        %v1356 = vadd.f32 0.0, %v1355
        %v1357 = vpop.f32.mrf.mxu0
        %v1358 = vpop.f32.mrf.mxu0
        %v1359 = vadd.f32 0.0, %v1358
        %v1360 = vpop.f32.mrf.mxu0
        %1361 = vmatprep.mubr.bf16.mxu0 0
        %1362 = vmatmul.mubr.bf16.gmra.mxu0 %v712
        %v1363 = vpop.f32.mrf.mxu0
        %v1364 = vadd.f32 0.0, %v1363
        %v1365 = vpop.f32.mrf.mxu0
        %v1366 = vpop.f32.mrf.mxu0
        %v1367 = vadd.f32 0.0, %v1366
        %v1368 = vpop.f32.mrf.mxu0
        %1369 = vdwg.mxu0
        %v1370 = vstv %s246
        %v1371 = vmul.f32 %v1370, %v860
        %v1372 = vmul.f32 %v1370, %v863
        %v1373 = vmul.f32 %v1370, %v868
        %v1374 = vmul.f32 %v1370, %v871
        %v1375 = vmul.f32 %v1370, %v876
        %v1376 = vmul.f32 %v1370, %v879
        %v1377 = vmul.f32 %v1370, %v884
        %v1378 = vmul.f32 %v1370, %v887
        %v1379 = vmul.f32 %v1370, %v892
        %v1380 = vmul.f32 %v1370, %v895
        %v1381 = vmul.f32 %v1370, %v900
        %v1382 = vmul.f32 %v1370, %v903
        %v1383 = vmul.f32 %v1370, %v908
        %v1384 = vmul.f32 %v1370, %v911
        %v1385 = vmul.f32 %v1370, %v916
        %v1386 = vmul.f32 %v1370, %v919
        %v1387 = vmul.f32 %v1370, %v924
        %v1388 = vmul.f32 %v1370, %v927
        %v1389 = vmul.f32 %v1370, %v932
        %v1390 = vmul.f32 %v1370, %v935
        %v1391 = vmul.f32 %v1370, %v940
        %v1392 = vmul.f32 %v1370, %v943
        %v1393 = vmul.f32 %v1370, %v948
        %v1394 = vmul.f32 %v1370, %v951
        %v1395 = vmul.f32 %v1370, %v956
        %v1396 = vmul.f32 %v1370, %v959
        %v1397 = vmul.f32 %v1370, %v964
        %v1398 = vmul.f32 %v1370, %v967
        %v1399 = vmul.f32 %v1370, %v972
        %v1400 = vmul.f32 %v1370, %v975
        %v1401 = vmul.f32 %v1370, %v980
        %v1402 = vmul.f32 %v1370, %v983
        %v1403 = vmul.f32 %v1370, %v988
        %v1404 = vmul.f32 %v1370, %v991
        %v1405 = vmul.f32 %v1370, %v996
        %v1406 = vmul.f32 %v1370, %v999
        %v1407 = vmul.f32 %v1370, %v1004
        %v1408 = vmul.f32 %v1370, %v1007
        %v1409 = vmul.f32 %v1370, %v1012
        %v1410 = vmul.f32 %v1370, %v1015
        %v1411 = vmul.f32 %v1370, %v1020
        %v1412 = vmul.f32 %v1370, %v1023
        %v1413 = vmul.f32 %v1370, %v1028
        %v1414 = vmul.f32 %v1370, %v1031
        %v1415 = vmul.f32 %v1370, %v1036
        %v1416 = vmul.f32 %v1370, %v1039
        %v1417 = vmul.f32 %v1370, %v1044
        %v1418 = vmul.f32 %v1370, %v1047
        %v1419 = vmul.f32 %v1370, %v1052
        %v1420 = vmul.f32 %v1370, %v1055
        %v1421 = vmul.f32 %v1370, %v1060
        %v1422 = vmul.f32 %v1370, %v1063
        %v1423 = vmul.f32 %v1370, %v1068
        %v1424 = vmul.f32 %v1370, %v1071
        %v1425 = vmul.f32 %v1370, %v1076
        %v1426 = vmul.f32 %v1370, %v1079
        %v1427 = vmul.f32 %v1370, %v1084
        %v1428 = vmul.f32 %v1370, %v1087
        %v1429 = vmul.f32 %v1370, %v1092
        %v1430 = vmul.f32 %v1370, %v1095
        %v1431 = vmul.f32 %v1370, %v1100
        %v1432 = vmul.f32 %v1370, %v1103
        %v1433 = vmul.f32 %v1370, %v1108
        %v1434 = vmul.f32 %v1370, %v1111
        %v1435 = vmul.f32 %v1370, %v1116
        %v1436 = vmul.f32 %v1370, %v1119
        %v1437 = vmul.f32 %v1370, %v1124
        %v1438 = vmul.f32 %v1370, %v1127
        %v1439 = vmul.f32 %v1370, %v1132
        %v1440 = vmul.f32 %v1370, %v1135
        %v1441 = vmul.f32 %v1370, %v1140
        %v1442 = vmul.f32 %v1370, %v1143
        %v1443 = vmul.f32 %v1370, %v1148
        %v1444 = vmul.f32 %v1370, %v1151
        %v1445 = vmul.f32 %v1370, %v1156
        %v1446 = vmul.f32 %v1370, %v1159
        %v1447 = vmul.f32 %v1370, %v1164
        %v1448 = vmul.f32 %v1370, %v1167
        %v1449 = vmul.f32 %v1370, %v1172
        %v1450 = vmul.f32 %v1370, %v1175
        %v1451 = vmul.f32 %v1370, %v1180
        %v1452 = vmul.f32 %v1370, %v1183
        %v1453 = vmul.f32 %v1370, %v1188
        %v1454 = vmul.f32 %v1370, %v1191
        %v1455 = vmul.f32 %v1370, %v1196
        %v1456 = vmul.f32 %v1370, %v1199
        %v1457 = vmul.f32 %v1370, %v1204
        %v1458 = vmul.f32 %v1370, %v1207
        %v1459 = vmul.f32 %v1370, %v1212
        %v1460 = vmul.f32 %v1370, %v1215
        %v1461 = vmul.f32 %v1370, %v1220
        %v1462 = vmul.f32 %v1370, %v1223
        %v1463 = vmul.f32 %v1370, %v1228
        %v1464 = vmul.f32 %v1370, %v1231
        %v1465 = vmul.f32 %v1370, %v1236
        %v1466 = vmul.f32 %v1370, %v1239
        %v1467 = vmul.f32 %v1370, %v1244
        %v1468 = vmul.f32 %v1370, %v1247
        %v1469 = vmul.f32 %v1370, %v1252
        %v1470 = vmul.f32 %v1370, %v1255
        %v1471 = vmul.f32 %v1370, %v1260
        %v1472 = vmul.f32 %v1370, %v1263
        %v1473 = vmul.f32 %v1370, %v1268
        %v1474 = vmul.f32 %v1370, %v1271
        %v1475 = vmul.f32 %v1370, %v1276
        %v1476 = vmul.f32 %v1370, %v1279
        %v1477 = vmul.f32 %v1370, %v1284
        %v1478 = vmul.f32 %v1370, %v1287
        %v1479 = vmul.f32 %v1370, %v1292
        %v1480 = vmul.f32 %v1370, %v1295
        %v1481 = vmul.f32 %v1370, %v1300
        %v1482 = vmul.f32 %v1370, %v1303
        %v1483 = vmul.f32 %v1370, %v1308
        %v1484 = vmul.f32 %v1370, %v1311
        %v1485 = vmul.f32 %v1370, %v1316
        %v1486 = vmul.f32 %v1370, %v1319
        %v1487 = vmul.f32 %v1370, %v1324
        %v1488 = vmul.f32 %v1370, %v1327
        %v1489 = vmul.f32 %v1370, %v1332
        %v1490 = vmul.f32 %v1370, %v1335
        %v1491 = vmul.f32 %v1370, %v1340
        %v1492 = vmul.f32 %v1370, %v1343
        %v1493 = vmul.f32 %v1370, %v1348
        %v1494 = vmul.f32 %v1370, %v1351
        %v1495 = vmul.f32 %v1370, %v1356
        %v1496 = vmul.f32 %v1370, %v1359
        %v1497 = vmul.f32 %v1370, %v1364
        %v1498 = vmul.f32 %v1370, %v1367
        %v1499 = vld [vmem:[%s3] sm:$0x1]
        %v1501 = vlaneseq
        %v1502 = vshrl.u32 %v1501, 7
        %v1503 = vsub.s32 0, %v1502
        %v1504 = vrot.slane %v1499, %v1503
        %v1506 = vadd.f32 %v1371, %v1504
        %v1507 = vadd.f32 %v1372, %v1504
        %v1508 = vadd.f32 %v1373, %v1504
        %v1509 = vadd.f32 %v1374, %v1504
        %v1510 = vadd.f32 %v1375, %v1504
        %v1511 = vadd.f32 %v1376, %v1504
        %v1512 = vadd.f32 %v1377, %v1504
        %v1513 = vadd.f32 %v1378, %v1504
        %v1514 = vadd.f32 %v1379, %v1504
        %v1515 = vadd.f32 %v1380, %v1504
        %v1516 = vadd.f32 %v1381, %v1504
        %v1517 = vadd.f32 %v1382, %v1504
        %v1518 = vadd.f32 %v1383, %v1504
        %v1519 = vadd.f32 %v1384, %v1504
        %v1520 = vadd.f32 %v1385, %v1504
        %v1521 = vadd.f32 %v1386, %v1504
        %v1522 = vadd.f32 %v1387, %v1504
        %v1523 = vadd.f32 %v1388, %v1504
        %v1524 = vadd.f32 %v1389, %v1504
        %v1525 = vadd.f32 %v1390, %v1504
        %v1526 = vadd.f32 %v1391, %v1504
        %v1527 = vadd.f32 %v1392, %v1504
        %v1528 = vadd.f32 %v1393, %v1504
        %v1529 = vadd.f32 %v1394, %v1504
        %v1530 = vadd.f32 %v1395, %v1504
        %v1531 = vadd.f32 %v1396, %v1504
        %v1532 = vadd.f32 %v1397, %v1504
        %v1533 = vadd.f32 %v1398, %v1504
        %v1534 = vadd.f32 %v1399, %v1504
        %v1535 = vadd.f32 %v1400, %v1504
        %v1536 = vadd.f32 %v1401, %v1504
        %v1537 = vadd.f32 %v1402, %v1504
        %v1538 = vadd.f32 %v1403, %v1504
        %v1539 = vadd.f32 %v1404, %v1504
        %v1540 = vadd.f32 %v1405, %v1504
        %v1541 = vadd.f32 %v1406, %v1504
        %v1542 = vadd.f32 %v1407, %v1504
        %v1543 = vadd.f32 %v1408, %v1504
        %v1544 = vadd.f32 %v1409, %v1504
        %v1545 = vadd.f32 %v1410, %v1504
        %v1546 = vadd.f32 %v1411, %v1504
        %v1547 = vadd.f32 %v1412, %v1504
        %v1548 = vadd.f32 %v1413, %v1504
        %v1549 = vadd.f32 %v1414, %v1504
        %v1550 = vadd.f32 %v1415, %v1504
        %v1551 = vadd.f32 %v1416, %v1504
        %v1552 = vadd.f32 %v1417, %v1504
        %v1553 = vadd.f32 %v1418, %v1504
        %v1554 = vadd.f32 %v1419, %v1504
        %v1555 = vadd.f32 %v1420, %v1504
        %v1556 = vadd.f32 %v1421, %v1504
        %v1557 = vadd.f32 %v1422, %v1504
        %v1558 = vadd.f32 %v1423, %v1504
        %v1559 = vadd.f32 %v1424, %v1504
        %v1560 = vadd.f32 %v1425, %v1504
        %v1561 = vadd.f32 %v1426, %v1504
        %v1562 = vadd.f32 %v1427, %v1504
        %v1563 = vadd.f32 %v1428, %v1504
        %v1564 = vadd.f32 %v1429, %v1504
        %v1565 = vadd.f32 %v1430, %v1504
        %v1566 = vadd.f32 %v1431, %v1504
        %v1567 = vadd.f32 %v1432, %v1504
        %v1568 = vadd.f32 %v1433, %v1504
        %v1569 = vadd.f32 %v1434, %v1504
        %v1570 = vadd.f32 %v1435, %v1504
        %v1571 = vadd.f32 %v1436, %v1504
        %v1572 = vadd.f32 %v1437, %v1504
        %v1573 = vadd.f32 %v1438, %v1504
        %v1574 = vadd.f32 %v1439, %v1504
        %v1575 = vadd.f32 %v1440, %v1504
        %v1576 = vadd.f32 %v1441, %v1504
        %v1577 = vadd.f32 %v1442, %v1504
        %v1578 = vadd.f32 %v1443, %v1504
        %v1579 = vadd.f32 %v1444, %v1504
        %v1580 = vadd.f32 %v1445, %v1504
        %v1581 = vadd.f32 %v1446, %v1504
        %v1582 = vadd.f32 %v1447, %v1504
        %v1583 = vadd.f32 %v1448, %v1504
        %v1584 = vadd.f32 %v1449, %v1504
        %v1585 = vadd.f32 %v1450, %v1504
        %v1586 = vadd.f32 %v1451, %v1504
        %v1587 = vadd.f32 %v1452, %v1504
        %v1588 = vadd.f32 %v1453, %v1504
        %v1589 = vadd.f32 %v1454, %v1504
        %v1590 = vadd.f32 %v1455, %v1504
        %v1591 = vadd.f32 %v1456, %v1504
        %v1592 = vadd.f32 %v1457, %v1504
        %v1593 = vadd.f32 %v1458, %v1504
        %v1594 = vadd.f32 %v1459, %v1504
        %v1595 = vadd.f32 %v1460, %v1504
        %v1596 = vadd.f32 %v1461, %v1504
        %v1597 = vadd.f32 %v1462, %v1504
        %v1598 = vadd.f32 %v1463, %v1504
        %v1599 = vadd.f32 %v1464, %v1504
        %v1600 = vadd.f32 %v1465, %v1504
        %v1601 = vadd.f32 %v1466, %v1504
        %v1602 = vadd.f32 %v1467, %v1504
        %v1603 = vadd.f32 %v1468, %v1504
        %v1604 = vadd.f32 %v1469, %v1504
        %v1605 = vadd.f32 %v1470, %v1504
        %v1606 = vadd.f32 %v1471, %v1504
        %v1607 = vadd.f32 %v1472, %v1504
        %v1608 = vadd.f32 %v1473, %v1504
        %v1609 = vadd.f32 %v1474, %v1504
        %v1610 = vadd.f32 %v1475, %v1504
        %v1611 = vadd.f32 %v1476, %v1504
        %v1612 = vadd.f32 %v1477, %v1504
        %v1613 = vadd.f32 %v1478, %v1504
        %v1614 = vadd.f32 %v1479, %v1504
        %v1615 = vadd.f32 %v1480, %v1504
        %v1616 = vadd.f32 %v1481, %v1504
        %v1617 = vadd.f32 %v1482, %v1504
        %v1618 = vadd.f32 %v1483, %v1504
        %v1619 = vadd.f32 %v1484, %v1504
        %v1620 = vadd.f32 %v1485, %v1504
        %v1621 = vadd.f32 %v1486, %v1504
        %v1622 = vadd.f32 %v1487, %v1504
        %v1623 = vadd.f32 %v1488, %v1504
        %v1624 = vadd.f32 %v1489, %v1504
        %v1625 = vadd.f32 %v1490, %v1504
        %v1626 = vadd.f32 %v1491, %v1504
        %v1627 = vadd.f32 %v1492, %v1504
        %v1628 = vadd.f32 %v1493, %v1504
        %v1629 = vadd.f32 %v1494, %v1504
        %v1630 = vadd.f32 %v1495, %v1504
        %v1631 = vadd.f32 %v1496, %v1504
        %v1632 = vadd.f32 %v1497, %v1504
        %v1633 = vadd.f32 %v1498, %v1504
        %v1634 = vmul.f32 %v1506, 1.442695
        %v1635 = vpow.pop %v1634
        %v1636 = vmul.f32 %v1507, 1.442695
        %v1637 = vpow.pop %v1636
        %v1638 = vmul.f32 %v1508, 1.442695
        %v1639 = vpow.pop %v1638
        %v1640 = vmul.f32 %v1509, 1.442695
        %v1641 = vpow.pop %v1640
        %v1642 = vmul.f32 %v1510, 1.442695
        %v1643 = vpow.pop %v1642
        %v1644 = vmul.f32 %v1511, 1.442695
        %v1645 = vpow.pop %v1644
        %v1646 = vmul.f32 %v1512, 1.442695
        %v1647 = vpow.pop %v1646
        %v1648 = vmul.f32 %v1513, 1.442695
        %v1649 = vpow.pop %v1648
        %v1650 = vmul.f32 %v1514, 1.442695
        %v1651 = vpow.pop %v1650
        %v1652 = vmul.f32 %v1515, 1.442695
        %v1653 = vpow.pop %v1652
        %v1654 = vmul.f32 %v1516, 1.442695
        %v1655 = vpow.pop %v1654
        %v1656 = vmul.f32 %v1517, 1.442695
        %v1657 = vpow.pop %v1656
        %v1658 = vmul.f32 %v1518, 1.442695
        %v1659 = vpow.pop %v1658
        %v1660 = vmul.f32 %v1519, 1.442695
        %v1661 = vpow.pop %v1660
        %v1662 = vmul.f32 %v1520, 1.442695
        %v1663 = vpow.pop %v1662
        %v1664 = vmul.f32 %v1521, 1.442695
        %v1665 = vpow.pop %v1664
        %v1666 = vmul.f32 %v1522, 1.442695
        %v1667 = vpow.pop %v1666
        %v1668 = vmul.f32 %v1523, 1.442695
        %v1669 = vpow.pop %v1668
        %v1670 = vmul.f32 %v1524, 1.442695
        %v1671 = vpow.pop %v1670
        %v1672 = vmul.f32 %v1525, 1.442695
        %v1673 = vpow.pop %v1672
        %v1674 = vmul.f32 %v1526, 1.442695
        %v1675 = vpow.pop %v1674
        %v1676 = vmul.f32 %v1527, 1.442695
        %v1677 = vpow.pop %v1676
        %v1678 = vmul.f32 %v1528, 1.442695
        %v1679 = vpow.pop %v1678
        %v1680 = vmul.f32 %v1529, 1.442695
        %v1681 = vpow.pop %v1680
        %v1682 = vmul.f32 %v1530, 1.442695
        %v1683 = vpow.pop %v1682
        %v1684 = vmul.f32 %v1531, 1.442695
        %v1685 = vpow.pop %v1684
        %v1686 = vmul.f32 %v1532, 1.442695
        %v1687 = vpow.pop %v1686
        %v1688 = vmul.f32 %v1533, 1.442695
        %v1689 = vpow.pop %v1688
        %v1690 = vmul.f32 %v1534, 1.442695
        %v1691 = vpow.pop %v1690
        %v1692 = vmul.f32 %v1535, 1.442695
        %v1693 = vpow.pop %v1692
        %v1694 = vmul.f32 %v1536, 1.442695
        %v1695 = vpow.pop %v1694
        %v1696 = vmul.f32 %v1537, 1.442695
        %v1697 = vpow.pop %v1696
        %v1698 = vmul.f32 %v1538, 1.442695
        %v1699 = vpow.pop %v1698
        %v1700 = vmul.f32 %v1539, 1.442695
        %v1701 = vpow.pop %v1700
        %v1702 = vmul.f32 %v1540, 1.442695
        %v1703 = vpow.pop %v1702
        %v1704 = vmul.f32 %v1541, 1.442695
        %v1705 = vpow.pop %v1704
        %v1706 = vmul.f32 %v1542, 1.442695
        %v1707 = vpow.pop %v1706
        %v1708 = vmul.f32 %v1543, 1.442695
        %v1709 = vpow.pop %v1708
        %v1710 = vmul.f32 %v1544, 1.442695
        %v1711 = vpow.pop %v1710
        %v1712 = vmul.f32 %v1545, 1.442695
        %v1713 = vpow.pop %v1712
        %v1714 = vmul.f32 %v1546, 1.442695
        %v1715 = vpow.pop %v1714
        %v1716 = vmul.f32 %v1547, 1.442695
        %v1717 = vpow.pop %v1716
        %v1718 = vmul.f32 %v1548, 1.442695
        %v1719 = vpow.pop %v1718
        %v1720 = vmul.f32 %v1549, 1.442695
        %v1721 = vpow.pop %v1720
        %v1722 = vmul.f32 %v1550, 1.442695
        %v1723 = vpow.pop %v1722
        %v1724 = vmul.f32 %v1551, 1.442695
        %v1725 = vpow.pop %v1724
        %v1726 = vmul.f32 %v1552, 1.442695
        %v1727 = vpow.pop %v1726
        %v1728 = vmul.f32 %v1553, 1.442695
        %v1729 = vpow.pop %v1728
        %v1730 = vmul.f32 %v1554, 1.442695
        %v1731 = vpow.pop %v1730
        %v1732 = vmul.f32 %v1555, 1.442695
        %v1733 = vpow.pop %v1732
        %v1734 = vmul.f32 %v1556, 1.442695
        %v1735 = vpow.pop %v1734
        %v1736 = vmul.f32 %v1557, 1.442695
        %v1737 = vpow.pop %v1736
        %v1738 = vmul.f32 %v1558, 1.442695
        %v1739 = vpow.pop %v1738
        %v1740 = vmul.f32 %v1559, 1.442695
        %v1741 = vpow.pop %v1740
        %v1742 = vmul.f32 %v1560, 1.442695
        %v1743 = vpow.pop %v1742
        %v1744 = vmul.f32 %v1561, 1.442695
        %v1745 = vpow.pop %v1744
        %v1746 = vmul.f32 %v1562, 1.442695
        %v1747 = vpow.pop %v1746
        %v1748 = vmul.f32 %v1563, 1.442695
        %v1749 = vpow.pop %v1748
        %v1750 = vmul.f32 %v1564, 1.442695
        %v1751 = vpow.pop %v1750
        %v1752 = vmul.f32 %v1565, 1.442695
        %v1753 = vpow.pop %v1752
        %v1754 = vmul.f32 %v1566, 1.442695
        %v1755 = vpow.pop %v1754
        %v1756 = vmul.f32 %v1567, 1.442695
        %v1757 = vpow.pop %v1756
        %v1758 = vmul.f32 %v1568, 1.442695
        %v1759 = vpow.pop %v1758
        %v1760 = vmul.f32 %v1569, 1.442695
        %v1761 = vpow.pop %v1760
        %v1762 = vmul.f32 %v1570, 1.442695
        %v1763 = vpow.pop %v1762
        %v1764 = vmul.f32 %v1571, 1.442695
        %v1765 = vpow.pop %v1764
        %v1766 = vmul.f32 %v1572, 1.442695
        %v1767 = vpow.pop %v1766
        %v1768 = vmul.f32 %v1573, 1.442695
        %v1769 = vpow.pop %v1768
        %v1770 = vmul.f32 %v1574, 1.442695
        %v1771 = vpow.pop %v1770
        %v1772 = vmul.f32 %v1575, 1.442695
        %v1773 = vpow.pop %v1772
        %v1774 = vmul.f32 %v1576, 1.442695
        %v1775 = vpow.pop %v1774
        %v1776 = vmul.f32 %v1577, 1.442695
        %v1777 = vpow.pop %v1776
        %v1778 = vmul.f32 %v1578, 1.442695
        %v1779 = vpow.pop %v1778
        %v1780 = vmul.f32 %v1579, 1.442695
        %v1781 = vpow.pop %v1780
        %v1782 = vmul.f32 %v1580, 1.442695
        %v1783 = vpow.pop %v1782
        %v1784 = vmul.f32 %v1581, 1.442695
        %v1785 = vpow.pop %v1784
        %v1786 = vmul.f32 %v1582, 1.442695
        %v1787 = vpow.pop %v1786
        %v1788 = vmul.f32 %v1583, 1.442695
        %v1789 = vpow.pop %v1788
        %v1790 = vmul.f32 %v1584, 1.442695
        %v1791 = vpow.pop %v1790
        %v1792 = vmul.f32 %v1585, 1.442695
        %v1793 = vpow.pop %v1792
        %v1794 = vmul.f32 %v1586, 1.442695
        %v1795 = vpow.pop %v1794
        %v1796 = vmul.f32 %v1587, 1.442695
        %v1797 = vpow.pop %v1796
        %v1798 = vmul.f32 %v1588, 1.442695
        %v1799 = vpow.pop %v1798
        %v1800 = vmul.f32 %v1589, 1.442695
        %v1801 = vpow.pop %v1800
        %v1802 = vmul.f32 %v1590, 1.442695
        %v1803 = vpow.pop %v1802
        %v1804 = vmul.f32 %v1591, 1.442695
        %v1805 = vpow.pop %v1804
        %v1806 = vmul.f32 %v1592, 1.442695
        %v1807 = vpow.pop %v1806
        %v1808 = vmul.f32 %v1593, 1.442695
        %v1809 = vpow.pop %v1808
        %v1810 = vmul.f32 %v1594, 1.442695
        %v1811 = vpow.pop %v1810
        %v1812 = vmul.f32 %v1595, 1.442695
        %v1813 = vpow.pop %v1812
        %v1814 = vmul.f32 %v1596, 1.442695
        %v1815 = vpow.pop %v1814
        %v1816 = vmul.f32 %v1597, 1.442695
        %v1817 = vpow.pop %v1816
        %v1818 = vmul.f32 %v1598, 1.442695
        %v1819 = vpow.pop %v1818
        %v1820 = vmul.f32 %v1599, 1.442695
        %v1821 = vpow.pop %v1820
        %v1822 = vmul.f32 %v1600, 1.442695
        %v1823 = vpow.pop %v1822
        %v1824 = vmul.f32 %v1601, 1.442695
        %v1825 = vpow.pop %v1824
        %v1826 = vmul.f32 %v1602, 1.442695
        %v1827 = vpow.pop %v1826
        %v1828 = vmul.f32 %v1603, 1.442695
        %v1829 = vpow.pop %v1828
        %v1830 = vmul.f32 %v1604, 1.442695
        %v1831 = vpow.pop %v1830
        %v1832 = vmul.f32 %v1605, 1.442695
        %v1833 = vpow.pop %v1832
        %v1834 = vmul.f32 %v1606, 1.442695
        %v1835 = vpow.pop %v1834
        %v1836 = vmul.f32 %v1607, 1.442695
        %v1837 = vpow.pop %v1836
        %v1838 = vmul.f32 %v1608, 1.442695
        %v1839 = vpow.pop %v1838
        %v1840 = vmul.f32 %v1609, 1.442695
        %v1841 = vpow.pop %v1840
        %v1842 = vmul.f32 %v1610, 1.442695
        %v1843 = vpow.pop %v1842
        %v1844 = vmul.f32 %v1611, 1.442695
        %v1845 = vpow.pop %v1844
        %v1846 = vmul.f32 %v1612, 1.442695
        %v1847 = vpow.pop %v1846
        %v1848 = vmul.f32 %v1613, 1.442695
        %v1849 = vpow.pop %v1848
        %v1850 = vmul.f32 %v1614, 1.442695
        %v1851 = vpow.pop %v1850
        %v1852 = vmul.f32 %v1615, 1.442695
        %v1853 = vpow.pop %v1852
        %v1854 = vmul.f32 %v1616, 1.442695
        %v1855 = vpow.pop %v1854
        %v1856 = vmul.f32 %v1617, 1.442695
        %v1857 = vpow.pop %v1856
        %v1858 = vmul.f32 %v1618, 1.442695
        %v1859 = vpow.pop %v1858
        %v1860 = vmul.f32 %v1619, 1.442695
        %v1861 = vpow.pop %v1860
        %v1862 = vmul.f32 %v1620, 1.442695
        %v1863 = vpow.pop %v1862
        %v1864 = vmul.f32 %v1621, 1.442695
        %v1865 = vpow.pop %v1864
        %v1866 = vmul.f32 %v1622, 1.442695
        %v1867 = vpow.pop %v1866
        %v1868 = vmul.f32 %v1623, 1.442695
        %v1869 = vpow.pop %v1868
        %v1870 = vmul.f32 %v1624, 1.442695
        %v1871 = vpow.pop %v1870
        %v1872 = vmul.f32 %v1625, 1.442695
        %v1873 = vpow.pop %v1872
        %v1874 = vmul.f32 %v1626, 1.442695
        %v1875 = vpow.pop %v1874
        %v1876 = vmul.f32 %v1627, 1.442695
        %v1877 = vpow.pop %v1876
        %v1878 = vmul.f32 %v1628, 1.442695
        %v1879 = vpow.pop %v1878
        %v1880 = vmul.f32 %v1629, 1.442695
        %v1881 = vpow.pop %v1880
        %v1882 = vmul.f32 %v1630, 1.442695
        %v1883 = vpow.pop %v1882
        %v1884 = vmul.f32 %v1631, 1.442695
        %v1885 = vpow.pop %v1884
        %v1886 = vmul.f32 %v1632, 1.442695
        %v1887 = vpow.pop %v1886
        %v1888 = vmul.f32 %v1633, 1.442695
        %v1889 = vpow.pop %v1888
        %1890 = vadd.xlane.f32.xlu0 %v1635
        %v1891 = vpop.xlane.xlu0 %1890
        %1892 = vadd.xlane.f32.xlu0 %v1637
        %v1893 = vpop.xlane.xlu0 %1892
        %1894 = vadd.xlane.f32.xlu0 %v1639
        %v1895 = vpop.xlane.xlu0 %1894
        %1896 = vadd.xlane.f32.xlu0 %v1641
        %v1897 = vpop.xlane.xlu0 %1896
        %1898 = vadd.xlane.f32.xlu0 %v1643
        %v1899 = vpop.xlane.xlu0 %1898
        %1900 = vadd.xlane.f32.xlu0 %v1645
        %v1901 = vpop.xlane.xlu0 %1900
        %1902 = vadd.xlane.f32.xlu0 %v1647
        %v1903 = vpop.xlane.xlu0 %1902
        %1904 = vadd.xlane.f32.xlu0 %v1649
        %v1905 = vpop.xlane.xlu0 %1904
        %1906 = vadd.xlane.f32.xlu0 %v1651
        %v1907 = vpop.xlane.xlu0 %1906
        %1908 = vadd.xlane.f32.xlu0 %v1653
        %v1909 = vpop.xlane.xlu0 %1908
        %1910 = vadd.xlane.f32.xlu0 %v1655
        %v1911 = vpop.xlane.xlu0 %1910
        %1912 = vadd.xlane.f32.xlu0 %v1657
        %v1913 = vpop.xlane.xlu0 %1912
        %1914 = vadd.xlane.f32.xlu0 %v1659
        %v1915 = vpop.xlane.xlu0 %1914
        %1916 = vadd.xlane.f32.xlu0 %v1661
        %v1917 = vpop.xlane.xlu0 %1916
        %1918 = vadd.xlane.f32.xlu0 %v1663
        %v1919 = vpop.xlane.xlu0 %1918
        %1920 = vadd.xlane.f32.xlu0 %v1665
        %v1921 = vpop.xlane.xlu0 %1920
        %1922 = vadd.xlane.f32.xlu0 %v1667
        %v1923 = vpop.xlane.xlu0 %1922
        %1924 = vadd.xlane.f32.xlu0 %v1669
        %v1925 = vpop.xlane.xlu0 %1924
        %1926 = vadd.xlane.f32.xlu0 %v1671
        %v1927 = vpop.xlane.xlu0 %1926
        %1928 = vadd.xlane.f32.xlu0 %v1673
        %v1929 = vpop.xlane.xlu0 %1928
        %1930 = vadd.xlane.f32.xlu0 %v1675
        %v1931 = vpop.xlane.xlu0 %1930
        %1932 = vadd.xlane.f32.xlu0 %v1677
        %v1933 = vpop.xlane.xlu0 %1932
        %1934 = vadd.xlane.f32.xlu0 %v1679
        %v1935 = vpop.xlane.xlu0 %1934
        %1936 = vadd.xlane.f32.xlu0 %v1681
        %v1937 = vpop.xlane.xlu0 %1936
        %1938 = vadd.xlane.f32.xlu0 %v1683
        %v1939 = vpop.xlane.xlu0 %1938
        %1940 = vadd.xlane.f32.xlu0 %v1685
        %v1941 = vpop.xlane.xlu0 %1940
        %1942 = vadd.xlane.f32.xlu0 %v1687
        %v1943 = vpop.xlane.xlu0 %1942
        %1944 = vadd.xlane.f32.xlu0 %v1689
        %v1945 = vpop.xlane.xlu0 %1944
        %1946 = vadd.xlane.f32.xlu0 %v1691
        %v1947 = vpop.xlane.xlu0 %1946
        %1948 = vadd.xlane.f32.xlu0 %v1693
        %v1949 = vpop.xlane.xlu0 %1948
        %1950 = vadd.xlane.f32.xlu0 %v1695
        %v1951 = vpop.xlane.xlu0 %1950
        %1952 = vadd.xlane.f32.xlu0 %v1697
        %v1953 = vpop.xlane.xlu0 %1952
        %1954 = vadd.xlane.f32.xlu0 %v1699
        %v1955 = vpop.xlane.xlu0 %1954
        %1956 = vadd.xlane.f32.xlu0 %v1701
        %v1957 = vpop.xlane.xlu0 %1956
        %1958 = vadd.xlane.f32.xlu0 %v1703
        %v1959 = vpop.xlane.xlu0 %1958
        %1960 = vadd.xlane.f32.xlu0 %v1705
        %v1961 = vpop.xlane.xlu0 %1960
        %1962 = vadd.xlane.f32.xlu0 %v1707
        %v1963 = vpop.xlane.xlu0 %1962
        %1964 = vadd.xlane.f32.xlu0 %v1709
        %v1965 = vpop.xlane.xlu0 %1964
        %1966 = vadd.xlane.f32.xlu0 %v1711
        %v1967 = vpop.xlane.xlu0 %1966
        %1968 = vadd.xlane.f32.xlu0 %v1713
        %v1969 = vpop.xlane.xlu0 %1968
        %1970 = vadd.xlane.f32.xlu0 %v1715
        %v1971 = vpop.xlane.xlu0 %1970
        %1972 = vadd.xlane.f32.xlu0 %v1717
        %v1973 = vpop.xlane.xlu0 %1972
        %1974 = vadd.xlane.f32.xlu0 %v1719
        %v1975 = vpop.xlane.xlu0 %1974
        %1976 = vadd.xlane.f32.xlu0 %v1721
        %v1977 = vpop.xlane.xlu0 %1976
        %1978 = vadd.xlane.f32.xlu0 %v1723
        %v1979 = vpop.xlane.xlu0 %1978
        %1980 = vadd.xlane.f32.xlu0 %v1725
        %v1981 = vpop.xlane.xlu0 %1980
        %1982 = vadd.xlane.f32.xlu0 %v1727
        %v1983 = vpop.xlane.xlu0 %1982
        %1984 = vadd.xlane.f32.xlu0 %v1729
        %v1985 = vpop.xlane.xlu0 %1984
        %1986 = vadd.xlane.f32.xlu0 %v1731
        %v1987 = vpop.xlane.xlu0 %1986
        %1988 = vadd.xlane.f32.xlu0 %v1733
        %v1989 = vpop.xlane.xlu0 %1988
        %1990 = vadd.xlane.f32.xlu0 %v1735
        %v1991 = vpop.xlane.xlu0 %1990
        %1992 = vadd.xlane.f32.xlu0 %v1737
        %v1993 = vpop.xlane.xlu0 %1992
        %1994 = vadd.xlane.f32.xlu0 %v1739
        %v1995 = vpop.xlane.xlu0 %1994
        %1996 = vadd.xlane.f32.xlu0 %v1741
        %v1997 = vpop.xlane.xlu0 %1996
        %1998 = vadd.xlane.f32.xlu0 %v1743
        %v1999 = vpop.xlane.xlu0 %1998
        %2000 = vadd.xlane.f32.xlu0 %v1745
        %v2001 = vpop.xlane.xlu0 %2000
        %2002 = vadd.xlane.f32.xlu0 %v1747
        %v2003 = vpop.xlane.xlu0 %2002
        %2004 = vadd.xlane.f32.xlu0 %v1749
        %v2005 = vpop.xlane.xlu0 %2004
        %2006 = vadd.xlane.f32.xlu0 %v1751
        %v2007 = vpop.xlane.xlu0 %2006
        %2008 = vadd.xlane.f32.xlu0 %v1753
        %v2009 = vpop.xlane.xlu0 %2008
        %2010 = vadd.xlane.f32.xlu0 %v1755
        %v2011 = vpop.xlane.xlu0 %2010
        %2012 = vadd.xlane.f32.xlu0 %v1757
        %v2013 = vpop.xlane.xlu0 %2012
        %2014 = vadd.xlane.f32.xlu0 %v1759
        %v2015 = vpop.xlane.xlu0 %2014
        %2016 = vadd.xlane.f32.xlu0 %v1761
        %v2017 = vpop.xlane.xlu0 %2016
        %2018 = vadd.xlane.f32.xlu0 %v1763
        %v2019 = vpop.xlane.xlu0 %2018
        %2020 = vadd.xlane.f32.xlu0 %v1765
        %v2021 = vpop.xlane.xlu0 %2020
        %2022 = vadd.xlane.f32.xlu0 %v1767
        %v2023 = vpop.xlane.xlu0 %2022
        %2024 = vadd.xlane.f32.xlu0 %v1769
        %v2025 = vpop.xlane.xlu0 %2024
        %2026 = vadd.xlane.f32.xlu0 %v1771
        %v2027 = vpop.xlane.xlu0 %2026
        %2028 = vadd.xlane.f32.xlu0 %v1773
        %v2029 = vpop.xlane.xlu0 %2028
        %2030 = vadd.xlane.f32.xlu0 %v1775
        %v2031 = vpop.xlane.xlu0 %2030
        %2032 = vadd.xlane.f32.xlu0 %v1777
        %v2033 = vpop.xlane.xlu0 %2032
        %2034 = vadd.xlane.f32.xlu0 %v1779
        %v2035 = vpop.xlane.xlu0 %2034
        %2036 = vadd.xlane.f32.xlu0 %v1781
        %v2037 = vpop.xlane.xlu0 %2036
        %2038 = vadd.xlane.f32.xlu0 %v1783
        %v2039 = vpop.xlane.xlu0 %2038
        %2040 = vadd.xlane.f32.xlu0 %v1785
        %v2041 = vpop.xlane.xlu0 %2040
        %2042 = vadd.xlane.f32.xlu0 %v1787
        %v2043 = vpop.xlane.xlu0 %2042
        %2044 = vadd.xlane.f32.xlu0 %v1789
        %v2045 = vpop.xlane.xlu0 %2044
        %2046 = vadd.xlane.f32.xlu0 %v1791
        %v2047 = vpop.xlane.xlu0 %2046
        %2048 = vadd.xlane.f32.xlu0 %v1793
        %v2049 = vpop.xlane.xlu0 %2048
        %2050 = vadd.xlane.f32.xlu0 %v1795
        %v2051 = vpop.xlane.xlu0 %2050
        %2052 = vadd.xlane.f32.xlu0 %v1797
        %v2053 = vpop.xlane.xlu0 %2052
        %2054 = vadd.xlane.f32.xlu0 %v1799
        %v2055 = vpop.xlane.xlu0 %2054
        %2056 = vadd.xlane.f32.xlu0 %v1801
        %v2057 = vpop.xlane.xlu0 %2056
        %2058 = vadd.xlane.f32.xlu0 %v1803
        %v2059 = vpop.xlane.xlu0 %2058
        %2060 = vadd.xlane.f32.xlu0 %v1805
        %v2061 = vpop.xlane.xlu0 %2060
        %2062 = vadd.xlane.f32.xlu0 %v1807
        %v2063 = vpop.xlane.xlu0 %2062
        %2064 = vadd.xlane.f32.xlu0 %v1809
        %v2065 = vpop.xlane.xlu0 %2064
        %2066 = vadd.xlane.f32.xlu0 %v1811
        %v2067 = vpop.xlane.xlu0 %2066
        %2068 = vadd.xlane.f32.xlu0 %v1813
        %v2069 = vpop.xlane.xlu0 %2068
        %2070 = vadd.xlane.f32.xlu0 %v1815
        %v2071 = vpop.xlane.xlu0 %2070
        %2072 = vadd.xlane.f32.xlu0 %v1817
        %v2073 = vpop.xlane.xlu0 %2072
        %2074 = vadd.xlane.f32.xlu0 %v1819
        %v2075 = vpop.xlane.xlu0 %2074
        %2076 = vadd.xlane.f32.xlu0 %v1821
        %v2077 = vpop.xlane.xlu0 %2076
        %2078 = vadd.xlane.f32.xlu0 %v1823
        %v2079 = vpop.xlane.xlu0 %2078
        %2080 = vadd.xlane.f32.xlu0 %v1825
        %v2081 = vpop.xlane.xlu0 %2080
        %2082 = vadd.xlane.f32.xlu0 %v1827
        %v2083 = vpop.xlane.xlu0 %2082
        %2084 = vadd.xlane.f32.xlu0 %v1829
        %v2085 = vpop.xlane.xlu0 %2084
        %2086 = vadd.xlane.f32.xlu0 %v1831
        %v2087 = vpop.xlane.xlu0 %2086
        %2088 = vadd.xlane.f32.xlu0 %v1833
        %v2089 = vpop.xlane.xlu0 %2088
        %2090 = vadd.xlane.f32.xlu0 %v1835
        %v2091 = vpop.xlane.xlu0 %2090
        %2092 = vadd.xlane.f32.xlu0 %v1837
        %v2093 = vpop.xlane.xlu0 %2092
        %2094 = vadd.xlane.f32.xlu0 %v1839
        %v2095 = vpop.xlane.xlu0 %2094
        %2096 = vadd.xlane.f32.xlu0 %v1841
        %v2097 = vpop.xlane.xlu0 %2096
        %2098 = vadd.xlane.f32.xlu0 %v1843
        %v2099 = vpop.xlane.xlu0 %2098
        %2100 = vadd.xlane.f32.xlu0 %v1845
        %v2101 = vpop.xlane.xlu0 %2100
        %2102 = vadd.xlane.f32.xlu0 %v1847
        %v2103 = vpop.xlane.xlu0 %2102
        %2104 = vadd.xlane.f32.xlu0 %v1849
        %v2105 = vpop.xlane.xlu0 %2104
        %2106 = vadd.xlane.f32.xlu0 %v1851
        %v2107 = vpop.xlane.xlu0 %2106
        %2108 = vadd.xlane.f32.xlu0 %v1853
        %v2109 = vpop.xlane.xlu0 %2108
        %2110 = vadd.xlane.f32.xlu0 %v1855
        %v2111 = vpop.xlane.xlu0 %2110
        %2112 = vadd.xlane.f32.xlu0 %v1857
        %v2113 = vpop.xlane.xlu0 %2112
        %2114 = vadd.xlane.f32.xlu0 %v1859
        %v2115 = vpop.xlane.xlu0 %2114
        %2116 = vadd.xlane.f32.xlu0 %v1861
        %v2117 = vpop.xlane.xlu0 %2116
        %2118 = vadd.xlane.f32.xlu0 %v1863
        %v2119 = vpop.xlane.xlu0 %2118
        %2120 = vadd.xlane.f32.xlu0 %v1865
        %v2121 = vpop.xlane.xlu0 %2120
        %2122 = vadd.xlane.f32.xlu0 %v1867
        %v2123 = vpop.xlane.xlu0 %2122
        %2124 = vadd.xlane.f32.xlu0 %v1869
        %v2125 = vpop.xlane.xlu0 %2124
        %2126 = vadd.xlane.f32.xlu0 %v1871
        %v2127 = vpop.xlane.xlu0 %2126
        %2128 = vadd.xlane.f32.xlu0 %v1873
        %v2129 = vpop.xlane.xlu0 %2128
        %2130 = vadd.xlane.f32.xlu0 %v1875
        %v2131 = vpop.xlane.xlu0 %2130
        %2132 = vadd.xlane.f32.xlu0 %v1877
        %v2133 = vpop.xlane.xlu0 %2132
        %2134 = vadd.xlane.f32.xlu0 %v1879
        %v2135 = vpop.xlane.xlu0 %2134
        %2136 = vadd.xlane.f32.xlu0 %v1881
        %v2137 = vpop.xlane.xlu0 %2136
        %2138 = vadd.xlane.f32.xlu0 %v1883
        %v2139 = vpop.xlane.xlu0 %2138
        %2140 = vadd.xlane.f32.xlu0 %v1885
        %v2141 = vpop.xlane.xlu0 %2140
        %2142 = vadd.xlane.f32.xlu0 %v1887
        %v2143 = vpop.xlane.xlu0 %2142
        %2144 = vadd.xlane.f32.xlu0 %v1889
        %v2145 = vpop.xlane.xlu0 %2144
        %v2146 = vstv %s248
        %v2147 = vmul.f32 %v1891, %v2146
        %v2148 = vmul.f32 %v1893, %v2146
        %v2149 = vmul.f32 %v1895, %v2146
        %v2150 = vmul.f32 %v1897, %v2146
        %v2151 = vmul.f32 %v1899, %v2146
        %v2152 = vmul.f32 %v1901, %v2146
        %v2153 = vmul.f32 %v1903, %v2146
        %v2154 = vmul.f32 %v1905, %v2146
        %v2155 = vmul.f32 %v1907, %v2146
        %v2156 = vmul.f32 %v1909, %v2146
        %v2157 = vmul.f32 %v1911, %v2146
        %v2158 = vmul.f32 %v1913, %v2146
        %v2159 = vmul.f32 %v1915, %v2146
        %v2160 = vmul.f32 %v1917, %v2146
        %v2161 = vmul.f32 %v1919, %v2146
        %v2162 = vmul.f32 %v1921, %v2146
        %v2163 = vmul.f32 %v1923, %v2146
        %v2164 = vmul.f32 %v1925, %v2146
        %v2165 = vmul.f32 %v1927, %v2146
        %v2166 = vmul.f32 %v1929, %v2146
        %v2167 = vmul.f32 %v1931, %v2146
        %v2168 = vmul.f32 %v1933, %v2146
        %v2169 = vmul.f32 %v1935, %v2146
        %v2170 = vmul.f32 %v1937, %v2146
        %v2171 = vmul.f32 %v1939, %v2146
        %v2172 = vmul.f32 %v1941, %v2146
        %v2173 = vmul.f32 %v1943, %v2146
        %v2174 = vmul.f32 %v1945, %v2146
        %v2175 = vmul.f32 %v1947, %v2146
        %v2176 = vmul.f32 %v1949, %v2146
        %v2177 = vmul.f32 %v1951, %v2146
        %v2178 = vmul.f32 %v1953, %v2146
        %v2179 = vmul.f32 %v1955, %v2146
        %v2180 = vmul.f32 %v1957, %v2146
        %v2181 = vmul.f32 %v1959, %v2146
        %v2182 = vmul.f32 %v1961, %v2146
        %v2183 = vmul.f32 %v1963, %v2146
        %v2184 = vmul.f32 %v1965, %v2146
        %v2185 = vmul.f32 %v1967, %v2146
        %v2186 = vmul.f32 %v1969, %v2146
        %v2187 = vmul.f32 %v1971, %v2146
        %v2188 = vmul.f32 %v1973, %v2146
        %v2189 = vmul.f32 %v1975, %v2146
        %v2190 = vmul.f32 %v1977, %v2146
        %v2191 = vmul.f32 %v1979, %v2146
        %v2192 = vmul.f32 %v1981, %v2146
        %v2193 = vmul.f32 %v1983, %v2146
        %v2194 = vmul.f32 %v1985, %v2146
        %v2195 = vmul.f32 %v1987, %v2146
        %v2196 = vmul.f32 %v1989, %v2146
        %v2197 = vmul.f32 %v1991, %v2146
        %v2198 = vmul.f32 %v1993, %v2146
        %v2199 = vmul.f32 %v1995, %v2146
        %v2200 = vmul.f32 %v1997, %v2146
        %v2201 = vmul.f32 %v1999, %v2146
        %v2202 = vmul.f32 %v2001, %v2146
        %v2203 = vmul.f32 %v2003, %v2146
        %v2204 = vmul.f32 %v2005, %v2146
        %v2205 = vmul.f32 %v2007, %v2146
        %v2206 = vmul.f32 %v2009, %v2146
        %v2207 = vmul.f32 %v2011, %v2146
        %v2208 = vmul.f32 %v2013, %v2146
        %v2209 = vmul.f32 %v2015, %v2146
        %v2210 = vmul.f32 %v2017, %v2146
        %v2211 = vmul.f32 %v2019, %v2146
        %v2212 = vmul.f32 %v2021, %v2146
        %v2213 = vmul.f32 %v2023, %v2146
        %v2214 = vmul.f32 %v2025, %v2146
        %v2215 = vmul.f32 %v2027, %v2146
        %v2216 = vmul.f32 %v2029, %v2146
        %v2217 = vmul.f32 %v2031, %v2146
        %v2218 = vmul.f32 %v2033, %v2146
        %v2219 = vmul.f32 %v2035, %v2146
        %v2220 = vmul.f32 %v2037, %v2146
        %v2221 = vmul.f32 %v2039, %v2146
        %v2222 = vmul.f32 %v2041, %v2146
        %v2223 = vmul.f32 %v2043, %v2146
        %v2224 = vmul.f32 %v2045, %v2146
        %v2225 = vmul.f32 %v2047, %v2146
        %v2226 = vmul.f32 %v2049, %v2146
        %v2227 = vmul.f32 %v2051, %v2146
        %v2228 = vmul.f32 %v2053, %v2146
        %v2229 = vmul.f32 %v2055, %v2146
        %v2230 = vmul.f32 %v2057, %v2146
        %v2231 = vmul.f32 %v2059, %v2146
        %v2232 = vmul.f32 %v2061, %v2146
        %v2233 = vmul.f32 %v2063, %v2146
        %v2234 = vmul.f32 %v2065, %v2146
        %v2235 = vmul.f32 %v2067, %v2146
        %v2236 = vmul.f32 %v2069, %v2146
        %v2237 = vmul.f32 %v2071, %v2146
        %v2238 = vmul.f32 %v2073, %v2146
        %v2239 = vmul.f32 %v2075, %v2146
        %v2240 = vmul.f32 %v2077, %v2146
        %v2241 = vmul.f32 %v2079, %v2146
        %v2242 = vmul.f32 %v2081, %v2146
        %v2243 = vmul.f32 %v2083, %v2146
        %v2244 = vmul.f32 %v2085, %v2146
        %v2245 = vmul.f32 %v2087, %v2146
        %v2246 = vmul.f32 %v2089, %v2146
        %v2247 = vmul.f32 %v2091, %v2146
        %v2248 = vmul.f32 %v2093, %v2146
        %v2249 = vmul.f32 %v2095, %v2146
        %v2250 = vmul.f32 %v2097, %v2146
        %v2251 = vmul.f32 %v2099, %v2146
        %v2252 = vmul.f32 %v2101, %v2146
        %v2253 = vmul.f32 %v2103, %v2146
        %v2254 = vmul.f32 %v2105, %v2146
        %v2255 = vmul.f32 %v2107, %v2146
        %v2256 = vmul.f32 %v2109, %v2146
        %v2257 = vmul.f32 %v2111, %v2146
        %v2258 = vmul.f32 %v2113, %v2146
        %v2259 = vmul.f32 %v2115, %v2146
        %v2260 = vmul.f32 %v2117, %v2146
        %v2261 = vmul.f32 %v2119, %v2146
        %v2262 = vmul.f32 %v2121, %v2146
        %v2263 = vmul.f32 %v2123, %v2146
        %v2264 = vmul.f32 %v2125, %v2146
        %v2265 = vmul.f32 %v2127, %v2146
        %v2266 = vmul.f32 %v2129, %v2146
        %v2267 = vmul.f32 %v2131, %v2146
        %v2268 = vmul.f32 %v2133, %v2146
        %v2269 = vmul.f32 %v2135, %v2146
        %v2270 = vmul.f32 %v2137, %v2146
        %v2271 = vmul.f32 %v2139, %v2146
        %v2272 = vmul.f32 %v2141, %v2146
        %v2273 = vmul.f32 %v2143, %v2146
        %v2274 = vmul.f32 %v2145, %v2146
        %v2275 = vstv %s245
        %v2276 = vsub.f32 %v2147, %v2275
        %v2277 = vsub.f32 %v2148, %v2275
        %v2278 = vsub.f32 %v2149, %v2275
        %v2279 = vsub.f32 %v2150, %v2275
        %v2280 = vsub.f32 %v2151, %v2275
        %v2281 = vsub.f32 %v2152, %v2275
        %v2282 = vsub.f32 %v2153, %v2275
        %v2283 = vsub.f32 %v2154, %v2275
        %v2284 = vsub.f32 %v2155, %v2275
        %v2285 = vsub.f32 %v2156, %v2275
        %v2286 = vsub.f32 %v2157, %v2275
        %v2287 = vsub.f32 %v2158, %v2275
        %v2288 = vsub.f32 %v2159, %v2275
        %v2289 = vsub.f32 %v2160, %v2275
        %v2290 = vsub.f32 %v2161, %v2275
        %v2291 = vsub.f32 %v2162, %v2275
        %v2292 = vsub.f32 %v2163, %v2275
        %v2293 = vsub.f32 %v2164, %v2275
        %v2294 = vsub.f32 %v2165, %v2275
        %v2295 = vsub.f32 %v2166, %v2275
        %v2296 = vsub.f32 %v2167, %v2275
        %v2297 = vsub.f32 %v2168, %v2275
        %v2298 = vsub.f32 %v2169, %v2275
        %v2299 = vsub.f32 %v2170, %v2275
        %v2300 = vsub.f32 %v2171, %v2275
        %v2301 = vsub.f32 %v2172, %v2275
        %v2302 = vsub.f32 %v2173, %v2275
        %v2303 = vsub.f32 %v2174, %v2275
        %v2304 = vsub.f32 %v2175, %v2275
        %v2305 = vsub.f32 %v2176, %v2275
        %v2306 = vsub.f32 %v2177, %v2275
        %v2307 = vsub.f32 %v2178, %v2275
        %v2308 = vsub.f32 %v2179, %v2275
        %v2309 = vsub.f32 %v2180, %v2275
        %v2310 = vsub.f32 %v2181, %v2275
        %v2311 = vsub.f32 %v2182, %v2275
        %v2312 = vsub.f32 %v2183, %v2275
        %v2313 = vsub.f32 %v2184, %v2275
        %v2314 = vsub.f32 %v2185, %v2275
        %v2315 = vsub.f32 %v2186, %v2275
        %v2316 = vsub.f32 %v2187, %v2275
        %v2317 = vsub.f32 %v2188, %v2275
        %v2318 = vsub.f32 %v2189, %v2275
        %v2319 = vsub.f32 %v2190, %v2275
        %v2320 = vsub.f32 %v2191, %v2275
        %v2321 = vsub.f32 %v2192, %v2275
        %v2322 = vsub.f32 %v2193, %v2275
        %v2323 = vsub.f32 %v2194, %v2275
        %v2324 = vsub.f32 %v2195, %v2275
        %v2325 = vsub.f32 %v2196, %v2275
        %v2326 = vsub.f32 %v2197, %v2275
        %v2327 = vsub.f32 %v2198, %v2275
        %v2328 = vsub.f32 %v2199, %v2275
        %v2329 = vsub.f32 %v2200, %v2275
        %v2330 = vsub.f32 %v2201, %v2275
        %v2331 = vsub.f32 %v2202, %v2275
        %v2332 = vsub.f32 %v2203, %v2275
        %v2333 = vsub.f32 %v2204, %v2275
        %v2334 = vsub.f32 %v2205, %v2275
        %v2335 = vsub.f32 %v2206, %v2275
        %v2336 = vsub.f32 %v2207, %v2275
        %v2337 = vsub.f32 %v2208, %v2275
        %v2338 = vsub.f32 %v2209, %v2275
        %v2339 = vsub.f32 %v2210, %v2275
        %v2340 = vsub.f32 %v2211, %v2275
        %v2341 = vsub.f32 %v2212, %v2275
        %v2342 = vsub.f32 %v2213, %v2275
        %v2343 = vsub.f32 %v2214, %v2275
        %v2344 = vsub.f32 %v2215, %v2275
        %v2345 = vsub.f32 %v2216, %v2275
        %v2346 = vsub.f32 %v2217, %v2275
        %v2347 = vsub.f32 %v2218, %v2275
        %v2348 = vsub.f32 %v2219, %v2275
        %v2349 = vsub.f32 %v2220, %v2275
        %v2350 = vsub.f32 %v2221, %v2275
        %v2351 = vsub.f32 %v2222, %v2275
        %v2352 = vsub.f32 %v2223, %v2275
        %v2353 = vsub.f32 %v2224, %v2275
        %v2354 = vsub.f32 %v2225, %v2275
        %v2355 = vsub.f32 %v2226, %v2275
        %v2356 = vsub.f32 %v2227, %v2275
        %v2357 = vsub.f32 %v2228, %v2275
        %v2358 = vsub.f32 %v2229, %v2275
        %v2359 = vsub.f32 %v2230, %v2275
        %v2360 = vsub.f32 %v2231, %v2275
        %v2361 = vsub.f32 %v2232, %v2275
        %v2362 = vsub.f32 %v2233, %v2275
        %v2363 = vsub.f32 %v2234, %v2275
        %v2364 = vsub.f32 %v2235, %v2275
        %v2365 = vsub.f32 %v2236, %v2275
        %v2366 = vsub.f32 %v2237, %v2275
        %v2367 = vsub.f32 %v2238, %v2275
        %v2368 = vsub.f32 %v2239, %v2275
        %v2369 = vsub.f32 %v2240, %v2275
        %v2370 = vsub.f32 %v2241, %v2275
        %v2371 = vsub.f32 %v2242, %v2275
        %v2372 = vsub.f32 %v2243, %v2275
        %v2373 = vsub.f32 %v2244, %v2275
        %v2374 = vsub.f32 %v2245, %v2275
        %v2375 = vsub.f32 %v2246, %v2275
        %v2376 = vsub.f32 %v2247, %v2275
        %v2377 = vsub.f32 %v2248, %v2275
        %v2378 = vsub.f32 %v2249, %v2275
        %v2379 = vsub.f32 %v2250, %v2275
        %v2380 = vsub.f32 %v2251, %v2275
        %v2381 = vsub.f32 %v2252, %v2275
        %v2382 = vsub.f32 %v2253, %v2275
        %v2383 = vsub.f32 %v2254, %v2275
        %v2384 = vsub.f32 %v2255, %v2275
        %v2385 = vsub.f32 %v2256, %v2275
        %v2386 = vsub.f32 %v2257, %v2275
        %v2387 = vsub.f32 %v2258, %v2275
        %v2388 = vsub.f32 %v2259, %v2275
        %v2389 = vsub.f32 %v2260, %v2275
        %v2390 = vsub.f32 %v2261, %v2275
        %v2391 = vsub.f32 %v2262, %v2275
        %v2392 = vsub.f32 %v2263, %v2275
        %v2393 = vsub.f32 %v2264, %v2275
        %v2394 = vsub.f32 %v2265, %v2275
        %v2395 = vsub.f32 %v2266, %v2275
        %v2396 = vsub.f32 %v2267, %v2275
        %v2397 = vsub.f32 %v2268, %v2275
        %v2398 = vsub.f32 %v2269, %v2275
        %v2399 = vsub.f32 %v2270, %v2275
        %v2400 = vsub.f32 %v2271, %v2275
        %v2401 = vsub.f32 %v2272, %v2275
        %v2402 = vsub.f32 %v2273, %v2275
        %v2403 = vsub.f32 %v2274, %v2275
        %v2404 = vstv %s247
        %v2405 = vmul.f32 %v2404, %v2276
        %v2406 = vmul.f32 %v2404, %v2277
        %v2407 = vmul.f32 %v2404, %v2278
        %v2408 = vmul.f32 %v2404, %v2279
        %v2409 = vmul.f32 %v2404, %v2280
        %v2410 = vmul.f32 %v2404, %v2281
        %v2411 = vmul.f32 %v2404, %v2282
        %v2412 = vmul.f32 %v2404, %v2283
        %v2413 = vmul.f32 %v2404, %v2284
        %v2414 = vmul.f32 %v2404, %v2285
        %v2415 = vmul.f32 %v2404, %v2286
        %v2416 = vmul.f32 %v2404, %v2287
        %v2417 = vmul.f32 %v2404, %v2288
        %v2418 = vmul.f32 %v2404, %v2289
        %v2419 = vmul.f32 %v2404, %v2290
        %v2420 = vmul.f32 %v2404, %v2291
        %v2421 = vmul.f32 %v2404, %v2292
        %v2422 = vmul.f32 %v2404, %v2293
        %v2423 = vmul.f32 %v2404, %v2294
        %v2424 = vmul.f32 %v2404, %v2295
        %v2425 = vmul.f32 %v2404, %v2296
        %v2426 = vmul.f32 %v2404, %v2297
        %v2427 = vmul.f32 %v2404, %v2298
        %v2428 = vmul.f32 %v2404, %v2299
        %v2429 = vmul.f32 %v2404, %v2300
        %v2430 = vmul.f32 %v2404, %v2301
        %v2431 = vmul.f32 %v2404, %v2302
        %v2432 = vmul.f32 %v2404, %v2303
        %v2433 = vmul.f32 %v2404, %v2304
        %v2434 = vmul.f32 %v2404, %v2305
        %v2435 = vmul.f32 %v2404, %v2306
        %v2436 = vmul.f32 %v2404, %v2307
        %v2437 = vmul.f32 %v2404, %v2308
        %v2438 = vmul.f32 %v2404, %v2309
        %v2439 = vmul.f32 %v2404, %v2310
        %v2440 = vmul.f32 %v2404, %v2311
        %v2441 = vmul.f32 %v2404, %v2312
        %v2442 = vmul.f32 %v2404, %v2313
        %v2443 = vmul.f32 %v2404, %v2314
        %v2444 = vmul.f32 %v2404, %v2315
        %v2445 = vmul.f32 %v2404, %v2316
        %v2446 = vmul.f32 %v2404, %v2317
        %v2447 = vmul.f32 %v2404, %v2318
        %v2448 = vmul.f32 %v2404, %v2319
        %v2449 = vmul.f32 %v2404, %v2320
        %v2450 = vmul.f32 %v2404, %v2321
        %v2451 = vmul.f32 %v2404, %v2322
        %v2452 = vmul.f32 %v2404, %v2323
        %v2453 = vmul.f32 %v2404, %v2324
        %v2454 = vmul.f32 %v2404, %v2325
        %v2455 = vmul.f32 %v2404, %v2326
        %v2456 = vmul.f32 %v2404, %v2327
        %v2457 = vmul.f32 %v2404, %v2328
        %v2458 = vmul.f32 %v2404, %v2329
        %v2459 = vmul.f32 %v2404, %v2330
        %v2460 = vmul.f32 %v2404, %v2331
        %v2461 = vmul.f32 %v2404, %v2332
        %v2462 = vmul.f32 %v2404, %v2333
        %v2463 = vmul.f32 %v2404, %v2334
        %v2464 = vmul.f32 %v2404, %v2335
        %v2465 = vmul.f32 %v2404, %v2336
        %v2466 = vmul.f32 %v2404, %v2337
        %v2467 = vmul.f32 %v2404, %v2338
        %v2468 = vmul.f32 %v2404, %v2339
        %v2469 = vmul.f32 %v2404, %v2340
        %v2470 = vmul.f32 %v2404, %v2341
        %v2471 = vmul.f32 %v2404, %v2342
        %v2472 = vmul.f32 %v2404, %v2343
        %v2473 = vmul.f32 %v2404, %v2344
        %v2474 = vmul.f32 %v2404, %v2345
        %v2475 = vmul.f32 %v2404, %v2346
        %v2476 = vmul.f32 %v2404, %v2347
        %v2477 = vmul.f32 %v2404, %v2348
        %v2478 = vmul.f32 %v2404, %v2349
        %v2479 = vmul.f32 %v2404, %v2350
        %v2480 = vmul.f32 %v2404, %v2351
        %v2481 = vmul.f32 %v2404, %v2352
        %v2482 = vmul.f32 %v2404, %v2353
        %v2483 = vmul.f32 %v2404, %v2354
        %v2484 = vmul.f32 %v2404, %v2355
        %v2485 = vmul.f32 %v2404, %v2356
        %v2486 = vmul.f32 %v2404, %v2357
        %v2487 = vmul.f32 %v2404, %v2358
        %v2488 = vmul.f32 %v2404, %v2359
        %v2489 = vmul.f32 %v2404, %v2360
        %v2490 = vmul.f32 %v2404, %v2361
        %v2491 = vmul.f32 %v2404, %v2362
        %v2492 = vmul.f32 %v2404, %v2363
        %v2493 = vmul.f32 %v2404, %v2364
        %v2494 = vmul.f32 %v2404, %v2365
        %v2495 = vmul.f32 %v2404, %v2366
        %v2496 = vmul.f32 %v2404, %v2367
        %v2497 = vmul.f32 %v2404, %v2368
        %v2498 = vmul.f32 %v2404, %v2369
        %v2499 = vmul.f32 %v2404, %v2370
        %v2500 = vmul.f32 %v2404, %v2371
        %v2501 = vmul.f32 %v2404, %v2372
        %v2502 = vmul.f32 %v2404, %v2373
        %v2503 = vmul.f32 %v2404, %v2374
        %v2504 = vmul.f32 %v2404, %v2375
        %v2505 = vmul.f32 %v2404, %v2376
        %v2506 = vmul.f32 %v2404, %v2377
        %v2507 = vmul.f32 %v2404, %v2378
        %v2508 = vmul.f32 %v2404, %v2379
        %v2509 = vmul.f32 %v2404, %v2380
        %v2510 = vmul.f32 %v2404, %v2381
        %v2511 = vmul.f32 %v2404, %v2382
        %v2512 = vmul.f32 %v2404, %v2383
        %v2513 = vmul.f32 %v2404, %v2384
        %v2514 = vmul.f32 %v2404, %v2385
        %v2515 = vmul.f32 %v2404, %v2386
        %v2516 = vmul.f32 %v2404, %v2387
        %v2517 = vmul.f32 %v2404, %v2388
        %v2518 = vmul.f32 %v2404, %v2389
        %v2519 = vmul.f32 %v2404, %v2390
        %v2520 = vmul.f32 %v2404, %v2391
        %v2521 = vmul.f32 %v2404, %v2392
        %v2522 = vmul.f32 %v2404, %v2393
        %v2523 = vmul.f32 %v2404, %v2394
        %v2524 = vmul.f32 %v2404, %v2395
        %v2525 = vmul.f32 %v2404, %v2396
        %v2526 = vmul.f32 %v2404, %v2397
        %v2527 = vmul.f32 %v2404, %v2398
        %v2528 = vmul.f32 %v2404, %v2399
        %v2529 = vmul.f32 %v2404, %v2400
        %v2530 = vmul.f32 %v2404, %v2401
        %v2531 = vmul.f32 %v2404, %v2402
        %v2532 = vmul.f32 %v2404, %v2403
        %v2533 = vmax.f32 %v2405, 0.0
        %v2534 = vmax.f32 %v2406, 0.0
        %v2535 = vmax.f32 %v2407, 0.0
        %v2536 = vmax.f32 %v2408, 0.0
        %v2537 = vmax.f32 %v2409, 0.0
        %v2538 = vmax.f32 %v2410, 0.0
        %v2539 = vmax.f32 %v2411, 0.0
        %v2540 = vmax.f32 %v2412, 0.0
        %v2541 = vmax.f32 %v2413, 0.0
        %v2542 = vmax.f32 %v2414, 0.0
        %v2543 = vmax.f32 %v2415, 0.0
        %v2544 = vmax.f32 %v2416, 0.0
        %v2545 = vmax.f32 %v2417, 0.0
        %v2546 = vmax.f32 %v2418, 0.0
        %v2547 = vmax.f32 %v2419, 0.0
        %v2548 = vmax.f32 %v2420, 0.0
        %v2549 = vmax.f32 %v2421, 0.0
        %v2550 = vmax.f32 %v2422, 0.0
        %v2551 = vmax.f32 %v2423, 0.0
        %v2552 = vmax.f32 %v2424, 0.0
        %v2553 = vmax.f32 %v2425, 0.0
        %v2554 = vmax.f32 %v2426, 0.0
        %v2555 = vmax.f32 %v2427, 0.0
        %v2556 = vmax.f32 %v2428, 0.0
        %v2557 = vmax.f32 %v2429, 0.0
        %v2558 = vmax.f32 %v2430, 0.0
        %v2559 = vmax.f32 %v2431, 0.0
        %v2560 = vmax.f32 %v2432, 0.0
        %v2561 = vmax.f32 %v2433, 0.0
        %v2562 = vmax.f32 %v2434, 0.0
        %v2563 = vmax.f32 %v2435, 0.0
        %v2564 = vmax.f32 %v2436, 0.0
        %v2565 = vmax.f32 %v2437, 0.0
        %v2566 = vmax.f32 %v2438, 0.0
        %v2567 = vmax.f32 %v2439, 0.0
        %v2568 = vmax.f32 %v2440, 0.0
        %v2569 = vmax.f32 %v2441, 0.0
        %v2570 = vmax.f32 %v2442, 0.0
        %v2571 = vmax.f32 %v2443, 0.0
        %v2572 = vmax.f32 %v2444, 0.0
        %v2573 = vmax.f32 %v2445, 0.0
        %v2574 = vmax.f32 %v2446, 0.0
        %v2575 = vmax.f32 %v2447, 0.0
        %v2576 = vmax.f32 %v2448, 0.0
        %v2577 = vmax.f32 %v2449, 0.0
        %v2578 = vmax.f32 %v2450, 0.0
        %v2579 = vmax.f32 %v2451, 0.0
        %v2580 = vmax.f32 %v2452, 0.0
        %v2581 = vmax.f32 %v2453, 0.0
        %v2582 = vmax.f32 %v2454, 0.0
        %v2583 = vmax.f32 %v2455, 0.0
        %v2584 = vmax.f32 %v2456, 0.0
        %v2585 = vmax.f32 %v2457, 0.0
        %v2586 = vmax.f32 %v2458, 0.0
        %v2587 = vmax.f32 %v2459, 0.0
        %v2588 = vmax.f32 %v2460, 0.0
        %v2589 = vmax.f32 %v2461, 0.0
        %v2590 = vmax.f32 %v2462, 0.0
        %v2591 = vmax.f32 %v2463, 0.0
        %v2592 = vmax.f32 %v2464, 0.0
        %v2593 = vmax.f32 %v2465, 0.0
        %v2594 = vmax.f32 %v2466, 0.0
        %v2595 = vmax.f32 %v2467, 0.0
        %v2596 = vmax.f32 %v2468, 0.0
        %v2597 = vmax.f32 %v2469, 0.0
        %v2598 = vmax.f32 %v2470, 0.0
        %v2599 = vmax.f32 %v2471, 0.0
        %v2600 = vmax.f32 %v2472, 0.0
        %v2601 = vmax.f32 %v2473, 0.0
        %v2602 = vmax.f32 %v2474, 0.0
        %v2603 = vmax.f32 %v2475, 0.0
        %v2604 = vmax.f32 %v2476, 0.0
        %v2605 = vmax.f32 %v2477, 0.0
        %v2606 = vmax.f32 %v2478, 0.0
        %v2607 = vmax.f32 %v2479, 0.0
        %v2608 = vmax.f32 %v2480, 0.0
        %v2609 = vmax.f32 %v2481, 0.0
        %v2610 = vmax.f32 %v2482, 0.0
        %v2611 = vmax.f32 %v2483, 0.0
        %v2612 = vmax.f32 %v2484, 0.0
        %v2613 = vmax.f32 %v2485, 0.0
        %v2614 = vmax.f32 %v2486, 0.0
        %v2615 = vmax.f32 %v2487, 0.0
        %v2616 = vmax.f32 %v2488, 0.0
        %v2617 = vmax.f32 %v2489, 0.0
        %v2618 = vmax.f32 %v2490, 0.0
        %v2619 = vmax.f32 %v2491, 0.0
        %v2620 = vmax.f32 %v2492, 0.0
        %v2621 = vmax.f32 %v2493, 0.0
        %v2622 = vmax.f32 %v2494, 0.0
        %v2623 = vmax.f32 %v2495, 0.0
        %v2624 = vmax.f32 %v2496, 0.0
        %v2625 = vmax.f32 %v2497, 0.0
        %v2626 = vmax.f32 %v2498, 0.0
        %v2627 = vmax.f32 %v2499, 0.0
        %v2628 = vmax.f32 %v2500, 0.0
        %v2629 = vmax.f32 %v2501, 0.0
        %v2630 = vmax.f32 %v2502, 0.0
        %v2631 = vmax.f32 %v2503, 0.0
        %v2632 = vmax.f32 %v2504, 0.0
        %v2633 = vmax.f32 %v2505, 0.0
        %v2634 = vmax.f32 %v2506, 0.0
        %v2635 = vmax.f32 %v2507, 0.0
        %v2636 = vmax.f32 %v2508, 0.0
        %v2637 = vmax.f32 %v2509, 0.0
        %v2638 = vmax.f32 %v2510, 0.0
        %v2639 = vmax.f32 %v2511, 0.0
        %v2640 = vmax.f32 %v2512, 0.0
        %v2641 = vmax.f32 %v2513, 0.0
        %v2642 = vmax.f32 %v2514, 0.0
        %v2643 = vmax.f32 %v2515, 0.0
        %v2644 = vmax.f32 %v2516, 0.0
        %v2645 = vmax.f32 %v2517, 0.0
        %v2646 = vmax.f32 %v2518, 0.0
        %v2647 = vmax.f32 %v2519, 0.0
        %v2648 = vmax.f32 %v2520, 0.0
        %v2649 = vmax.f32 %v2521, 0.0
        %v2650 = vmax.f32 %v2522, 0.0
        %v2651 = vmax.f32 %v2523, 0.0
        %v2652 = vmax.f32 %v2524, 0.0
        %v2653 = vmax.f32 %v2525, 0.0
        %v2654 = vmax.f32 %v2526, 0.0
        %v2655 = vmax.f32 %v2527, 0.0
        %v2656 = vmax.f32 %v2528, 0.0
        %v2657 = vmax.f32 %v2529, 0.0
        %v2658 = vmax.f32 %v2530, 0.0
        %v2659 = vmax.f32 %v2531, 0.0
        %v2660 = vmax.f32 %v2532, 0.0
        %vm2661 = vcmask 7168
        %v2662 = vsel %vm2661, %v2533, 0.0
        %v2663 = vsel %vm2661, %v2534, 0.0
        %v2664 = vadd.f32 %v2662, %v2663
        %v2665 = vsel %vm2661, %v2535, 0.0
        %v2666 = vadd.f32 %v2664, %v2665
        %v2667 = vsel %vm2661, %v2536, 0.0
        %v2668 = vadd.f32 %v2666, %v2667
        %v2669 = vsel %vm2661, %v2537, 0.0
        %v2670 = vadd.f32 %v2668, %v2669
        %v2671 = vsel %vm2661, %v2538, 0.0
        %v2672 = vadd.f32 %v2670, %v2671
        %v2673 = vsel %vm2661, %v2539, 0.0
        %v2674 = vadd.f32 %v2672, %v2673
        %v2675 = vsel %vm2661, %v2540, 0.0
        %v2676 = vadd.f32 %v2674, %v2675
        %v2677 = vsel %vm2661, %v2541, 0.0
        %v2678 = vadd.f32 %v2676, %v2677
        %v2679 = vsel %vm2661, %v2542, 0.0
        %v2680 = vadd.f32 %v2678, %v2679
        %v2681 = vsel %vm2661, %v2543, 0.0
        %v2682 = vadd.f32 %v2680, %v2681
        %v2683 = vsel %vm2661, %v2544, 0.0
        %v2684 = vadd.f32 %v2682, %v2683
        %v2685 = vsel %vm2661, %v2545, 0.0
        %v2686 = vadd.f32 %v2684, %v2685
        %v2687 = vsel %vm2661, %v2546, 0.0
        %v2688 = vadd.f32 %v2686, %v2687
        %v2689 = vsel %vm2661, %v2547, 0.0
        %v2690 = vadd.f32 %v2688, %v2689
        %v2691 = vsel %vm2661, %v2548, 0.0
        %v2692 = vadd.f32 %v2690, %v2691
        %v2693 = vsel %vm2661, %v2549, 0.0
        %v2694 = vadd.f32 %v2692, %v2693
        %v2695 = vsel %vm2661, %v2550, 0.0
        %v2696 = vadd.f32 %v2694, %v2695
        %v2697 = vsel %vm2661, %v2551, 0.0
        %v2698 = vadd.f32 %v2696, %v2697
        %v2699 = vsel %vm2661, %v2552, 0.0
        %v2700 = vadd.f32 %v2698, %v2699
        %v2701 = vsel %vm2661, %v2553, 0.0
        %v2702 = vadd.f32 %v2700, %v2701
        %v2703 = vsel %vm2661, %v2554, 0.0
        %v2704 = vadd.f32 %v2702, %v2703
        %v2705 = vsel %vm2661, %v2555, 0.0
        %v2706 = vadd.f32 %v2704, %v2705
        %v2707 = vsel %vm2661, %v2556, 0.0
        %v2708 = vadd.f32 %v2706, %v2707
        %v2709 = vsel %vm2661, %v2557, 0.0
        %v2710 = vadd.f32 %v2708, %v2709
        %v2711 = vsel %vm2661, %v2558, 0.0
        %v2712 = vadd.f32 %v2710, %v2711
        %v2713 = vsel %vm2661, %v2559, 0.0
        %v2714 = vadd.f32 %v2712, %v2713
        %v2715 = vsel %vm2661, %v2560, 0.0
        %v2716 = vadd.f32 %v2714, %v2715
        %v2717 = vsel %vm2661, %v2561, 0.0
        %v2718 = vadd.f32 %v2716, %v2717
        %v2719 = vsel %vm2661, %v2562, 0.0
        %v2720 = vadd.f32 %v2718, %v2719
        %v2721 = vsel %vm2661, %v2563, 0.0
        %v2722 = vadd.f32 %v2720, %v2721
        %v2723 = vsel %vm2661, %v2564, 0.0
        %v2724 = vadd.f32 %v2722, %v2723
        %v2725 = vsel %vm2661, %v2565, 0.0
        %v2726 = vadd.f32 %v2724, %v2725
        %v2727 = vsel %vm2661, %v2566, 0.0
        %v2728 = vadd.f32 %v2726, %v2727
        %v2729 = vsel %vm2661, %v2567, 0.0
        %v2730 = vadd.f32 %v2728, %v2729
        %v2731 = vsel %vm2661, %v2568, 0.0
        %v2732 = vadd.f32 %v2730, %v2731
        %v2733 = vsel %vm2661, %v2569, 0.0
        %v2734 = vadd.f32 %v2732, %v2733
        %v2735 = vsel %vm2661, %v2570, 0.0
        %v2736 = vadd.f32 %v2734, %v2735
        %v2737 = vsel %vm2661, %v2571, 0.0
        %v2738 = vadd.f32 %v2736, %v2737
        %v2739 = vsel %vm2661, %v2572, 0.0
        %v2740 = vadd.f32 %v2738, %v2739
        %v2741 = vsel %vm2661, %v2573, 0.0
        %v2742 = vadd.f32 %v2740, %v2741
        %v2743 = vsel %vm2661, %v2574, 0.0
        %v2744 = vadd.f32 %v2742, %v2743
        %v2745 = vsel %vm2661, %v2575, 0.0
        %v2746 = vadd.f32 %v2744, %v2745
        %v2747 = vsel %vm2661, %v2576, 0.0
        %v2748 = vadd.f32 %v2746, %v2747
        %v2749 = vsel %vm2661, %v2577, 0.0
        %v2750 = vadd.f32 %v2748, %v2749
        %v2751 = vsel %vm2661, %v2578, 0.0
        %v2752 = vadd.f32 %v2750, %v2751
        %v2753 = vsel %vm2661, %v2579, 0.0
        %v2754 = vadd.f32 %v2752, %v2753
        %v2755 = vsel %vm2661, %v2580, 0.0
        %v2756 = vadd.f32 %v2754, %v2755
        %v2757 = vsel %vm2661, %v2581, 0.0
        %v2758 = vadd.f32 %v2756, %v2757
        %v2759 = vsel %vm2661, %v2582, 0.0
        %v2760 = vadd.f32 %v2758, %v2759
        %v2761 = vsel %vm2661, %v2583, 0.0
        %v2762 = vadd.f32 %v2760, %v2761
        %v2763 = vsel %vm2661, %v2584, 0.0
        %v2764 = vadd.f32 %v2762, %v2763
        %v2765 = vsel %vm2661, %v2585, 0.0
        %v2766 = vadd.f32 %v2764, %v2765
        %v2767 = vsel %vm2661, %v2586, 0.0
        %v2768 = vadd.f32 %v2766, %v2767
        %v2769 = vsel %vm2661, %v2587, 0.0
        %v2770 = vadd.f32 %v2768, %v2769
        %v2771 = vsel %vm2661, %v2588, 0.0
        %v2772 = vadd.f32 %v2770, %v2771
        %v2773 = vsel %vm2661, %v2589, 0.0
        %v2774 = vadd.f32 %v2772, %v2773
        %v2775 = vsel %vm2661, %v2590, 0.0
        %v2776 = vadd.f32 %v2774, %v2775
        %v2777 = vsel %vm2661, %v2591, 0.0
        %v2778 = vadd.f32 %v2776, %v2777
        %v2779 = vsel %vm2661, %v2592, 0.0
        %v2780 = vadd.f32 %v2778, %v2779
        %v2781 = vsel %vm2661, %v2593, 0.0
        %v2782 = vadd.f32 %v2780, %v2781
        %v2783 = vsel %vm2661, %v2594, 0.0
        %v2784 = vadd.f32 %v2782, %v2783
        %v2785 = vsel %vm2661, %v2595, 0.0
        %v2786 = vadd.f32 %v2784, %v2785
        %v2787 = vsel %vm2661, %v2596, 0.0
        %v2788 = vadd.f32 %v2786, %v2787
        %v2789 = vsel %vm2661, %v2597, 0.0
        %v2790 = vadd.f32 %v2788, %v2789
        %v2791 = vsel %vm2661, %v2598, 0.0
        %v2792 = vadd.f32 %v2790, %v2791
        %v2793 = vsel %vm2661, %v2599, 0.0
        %v2794 = vadd.f32 %v2792, %v2793
        %v2795 = vsel %vm2661, %v2600, 0.0
        %v2796 = vadd.f32 %v2794, %v2795
        %v2797 = vsel %vm2661, %v2601, 0.0
        %v2798 = vadd.f32 %v2796, %v2797
        %v2799 = vsel %vm2661, %v2602, 0.0
        %v2800 = vadd.f32 %v2798, %v2799
        %v2801 = vsel %vm2661, %v2603, 0.0
        %v2802 = vadd.f32 %v2800, %v2801
        %v2803 = vsel %vm2661, %v2604, 0.0
        %v2804 = vadd.f32 %v2802, %v2803
        %v2805 = vsel %vm2661, %v2605, 0.0
        %v2806 = vadd.f32 %v2804, %v2805
        %v2807 = vsel %vm2661, %v2606, 0.0
        %v2808 = vadd.f32 %v2806, %v2807
        %v2809 = vsel %vm2661, %v2607, 0.0
        %v2810 = vadd.f32 %v2808, %v2809
        %v2811 = vsel %vm2661, %v2608, 0.0
        %v2812 = vadd.f32 %v2810, %v2811
        %v2813 = vsel %vm2661, %v2609, 0.0
        %v2814 = vadd.f32 %v2812, %v2813
        %v2815 = vsel %vm2661, %v2610, 0.0
        %v2816 = vadd.f32 %v2814, %v2815
        %v2817 = vsel %vm2661, %v2611, 0.0
        %v2818 = vadd.f32 %v2816, %v2817
        %v2819 = vsel %vm2661, %v2612, 0.0
        %v2820 = vadd.f32 %v2818, %v2819
        %v2821 = vsel %vm2661, %v2613, 0.0
        %v2822 = vadd.f32 %v2820, %v2821
        %v2823 = vsel %vm2661, %v2614, 0.0
        %v2824 = vadd.f32 %v2822, %v2823
        %v2825 = vsel %vm2661, %v2615, 0.0
        %v2826 = vadd.f32 %v2824, %v2825
        %v2827 = vsel %vm2661, %v2616, 0.0
        %v2828 = vadd.f32 %v2826, %v2827
        %v2829 = vsel %vm2661, %v2617, 0.0
        %v2830 = vadd.f32 %v2828, %v2829
        %v2831 = vsel %vm2661, %v2618, 0.0
        %v2832 = vadd.f32 %v2830, %v2831
        %v2833 = vsel %vm2661, %v2619, 0.0
        %v2834 = vadd.f32 %v2832, %v2833
        %v2835 = vsel %vm2661, %v2620, 0.0
        %v2836 = vadd.f32 %v2834, %v2835
        %v2837 = vsel %vm2661, %v2621, 0.0
        %v2838 = vadd.f32 %v2836, %v2837
        %v2839 = vsel %vm2661, %v2622, 0.0
        %v2840 = vadd.f32 %v2838, %v2839
        %v2841 = vsel %vm2661, %v2623, 0.0
        %v2842 = vadd.f32 %v2840, %v2841
        %v2843 = vsel %vm2661, %v2624, 0.0
        %v2844 = vadd.f32 %v2842, %v2843
        %v2845 = vsel %vm2661, %v2625, 0.0
        %v2846 = vadd.f32 %v2844, %v2845
        %v2847 = vsel %vm2661, %v2626, 0.0
        %v2848 = vadd.f32 %v2846, %v2847
        %v2849 = vsel %vm2661, %v2627, 0.0
        %v2850 = vadd.f32 %v2848, %v2849
        %v2851 = vsel %vm2661, %v2628, 0.0
        %v2852 = vadd.f32 %v2850, %v2851
        %v2853 = vsel %vm2661, %v2629, 0.0
        %v2854 = vadd.f32 %v2852, %v2853
        %v2855 = vsel %vm2661, %v2630, 0.0
        %v2856 = vadd.f32 %v2854, %v2855
        %v2857 = vsel %vm2661, %v2631, 0.0
        %v2858 = vadd.f32 %v2856, %v2857
        %v2859 = vsel %vm2661, %v2632, 0.0
        %v2860 = vadd.f32 %v2858, %v2859
        %v2861 = vsel %vm2661, %v2633, 0.0
        %v2862 = vadd.f32 %v2860, %v2861
        %v2863 = vsel %vm2661, %v2634, 0.0
        %v2864 = vadd.f32 %v2862, %v2863
        %v2865 = vsel %vm2661, %v2635, 0.0
        %v2866 = vadd.f32 %v2864, %v2865
        %v2867 = vsel %vm2661, %v2636, 0.0
        %v2868 = vadd.f32 %v2866, %v2867
        %v2869 = vsel %vm2661, %v2637, 0.0
        %v2870 = vadd.f32 %v2868, %v2869
        %v2871 = vsel %vm2661, %v2638, 0.0
        %v2872 = vadd.f32 %v2870, %v2871
        %v2873 = vsel %vm2661, %v2639, 0.0
        %v2874 = vadd.f32 %v2872, %v2873
        %v2875 = vsel %vm2661, %v2640, 0.0
        %v2876 = vadd.f32 %v2874, %v2875
        %v2877 = vsel %vm2661, %v2641, 0.0
        %v2878 = vadd.f32 %v2876, %v2877
        %v2879 = vsel %vm2661, %v2642, 0.0
        %v2880 = vadd.f32 %v2878, %v2879
        %v2881 = vsel %vm2661, %v2643, 0.0
        %v2882 = vadd.f32 %v2880, %v2881
        %v2883 = vsel %vm2661, %v2644, 0.0
        %v2884 = vadd.f32 %v2882, %v2883
        %v2885 = vsel %vm2661, %v2645, 0.0
        %v2886 = vadd.f32 %v2884, %v2885
        %v2887 = vsel %vm2661, %v2646, 0.0
        %v2888 = vadd.f32 %v2886, %v2887
        %v2889 = vsel %vm2661, %v2647, 0.0
        %v2890 = vadd.f32 %v2888, %v2889
        %v2891 = vsel %vm2661, %v2648, 0.0
        %v2892 = vadd.f32 %v2890, %v2891
        %v2893 = vsel %vm2661, %v2649, 0.0
        %v2894 = vadd.f32 %v2892, %v2893
        %v2895 = vsel %vm2661, %v2650, 0.0
        %v2896 = vadd.f32 %v2894, %v2895
        %v2897 = vsel %vm2661, %v2651, 0.0
        %v2898 = vadd.f32 %v2896, %v2897
        %v2899 = vsel %vm2661, %v2652, 0.0
        %v2900 = vadd.f32 %v2898, %v2899
        %v2901 = vsel %vm2661, %v2653, 0.0
        %v2902 = vadd.f32 %v2900, %v2901
        %v2903 = vsel %vm2661, %v2654, 0.0
        %v2904 = vadd.f32 %v2902, %v2903
        %v2905 = vsel %vm2661, %v2655, 0.0
        %v2906 = vadd.f32 %v2904, %v2905
        %v2907 = vsel %vm2661, %v2656, 0.0
        %v2908 = vadd.f32 %v2906, %v2907
        %v2909 = vsel %vm2661, %v2657, 0.0
        %v2910 = vadd.f32 %v2908, %v2909
        %v2911 = vsel %vm2661, %v2658, 0.0
        %v2912 = vadd.f32 %v2910, %v2911
        %v2913 = vsel %vm2661, %v2659, 0.0
        %v2914 = vadd.f32 %v2912, %v2913
        %v2915 = vsel %vm2661, %v2660, 0.0
        %v2916 = vadd.f32 %v2914, %v2915
        %2917 = vadd.xlane.f32.xlu0 %v2916
        %v2918 = vpop.xlane.xlu0 %2917
        %v2919 = vrot.slane %v2918, 4
        %v2920 = vadd.f32 %v2918, %v2919
        %v2921 = vrot.slane %v2920, 2
        %v2922 = vadd.f32 %v2920, %v2921
        %v2923 = vrot.slane %v2922, 1
        %v2924 = vadd.f32 %v2922, %v2923
        %s2925 = vtos %v2924
        %v2926 = vstv %s2925
        %2927 = vst [vmem:[%s242] sm:$0xff] %v2926
        %s2928 = sand.u32 %s120, 1
        %s2929 = scalar_lea.sflag [#allocation4], %s2928
        %s2930 = sand.u32 %s120, 1
        %s2931 = smul.addr %s2930, 8
        %s2932 = scalar_lea.vmem [#allocation9], %s2931
        // Predicated region
        $region49: #{tpu_custom_call.1} parent=35 // pred_check
          %p2933 = pneg %p130
        $region50: #{tpu_custom_call.1} parent=35 // pred_check_branch
          %2935 = sbr.rel (%p2933) target = $region52
        $region51: #{tpu_custom_call.1} parent=35 // pred_region
          %s2937 = ssub.s32 128, 128
          %2938 = vsyncadd %s2929, %s2937
          %s2939 = smul.addr %s23, 128
          %s2940 = scalar_lea.hbm %s4, %s2939
          %s2942 = sshll.u32 %s2932, 4
          %s2943 = int_to_ptr.vmem [resolvable:$true] %s2942
          %2945 = dma.vmem_to_hbm [thread:$0]  %s2943, 128, %s2940, %s2929
        $region52: #{tpu_custom_call.1} parent=35 // pred_fallthru
          _
      $region36: #{tpu_custom_call.1} parent=5 // pred_fallthru
        _
      %p2946 = scmp.le.s32.totalorder 2, %s18
      // Predicated region
      $region53: #{tpu_custom_call.1} parent=5 // pred_check
        %p2947 = pneg %p2946
      $region54: #{tpu_custom_call.1} parent=5 // pred_check_branch
        %2949 = sbr.rel (%p2947) target = $region56
      $region55: #{tpu_custom_call.1} parent=5 // pred_region
        %s2950 = ssub.s32 %s18, 2
        // Predicated region
        $region57: #{tpu_custom_call.1} parent=55 // pred_check
          %p2951 = pneg %p136
        $region58: #{tpu_custom_call.1} parent=55 // pred_check_branch
          %2953 = sbr.rel (%p2951) target = $region60
        $region59: #{tpu_custom_call.1} parent=55 // pred_region
          %s2954 = sand.u32 %s121, 1
          %s2955 = scalar_lea.sflag [#allocation4], %s2954
          %s2956 = sand.u32 %s121, 1
          %s2957 = smul.addr %s2956, 8
          %s2958 = scalar_lea.vmem [#allocation9], %s2957
          %2959 = dma.done %s2955, 128
        $region60: #{tpu_custom_call.1} parent=55 // pred_fallthru
          _
      $region56: #{tpu_custom_call.1} parent=5 // pred_fallthru
        _
    $region6: #{tpu_custom_call.1} parent=1 // loop_footer
      %s22 = sadd.s32 1, %s18
    $region7: #{tpu_custom_call.1} parent=1 // loop_footer_branch
      %17 = sbr.rel target = $region3
    $region8: #{tpu_custom_call.1} parent=1 // loop_exit
      _
    %2960 = vsyncpa [#allocation3], 1
    %s2961 = scalar_lea.sflag [#allocation3], 1
    %2962 = vsyncpa %s2961, 1
    %2963 = vsyncpa [#allocation8], 1
    %2964 = vsyncpa [#allocation4], 1
    %s2965 = scalar_lea.sflag [#allocation4], 1
    %2966 = vsyncpa %s2965, 1
    %2967 = vsyncpa [#allocation5], 1
    %s2968 = scalar_lea.sflag [#allocation5], 1
    %2969 = vsyncpa %s2968, 1

</llo_original>
